<compile_context>
chip_gen: v6e
topology: v6e:2x2x1
jax: 0.10.0
libtpu: 0.0.40
codegen_flags: <defaults>
</compile_context>

<pallas_src>
import jax
import jax.numpy as jnp
from jax.experimental import pallas as pl
from jax.experimental.pallas import tpu as pltpu


def mapping_kernel(tile_dom_ref, z_ref, w_in_ref, b_sh_ref, w_sh_ref,
                   w_un_ref, b_un_ref, out_ref):
    """One batch tile; all its rows belong to a single (prefetch-selected) domain."""
    del tile_dom_ref  # consumed only by the weight index_maps

    def linear(x_bf16, w_bf16, b_f32):
        return jnp.dot(x_bf16, w_bf16,
                       preferred_element_type=jnp.float32) + b_f32

    # ---- shared trunk: Linear(latent, style)+ReLU, then 3x Linear(style, style)+ReLU
    h = jnp.maximum(linear(z_ref[...], w_in_ref[...], b_sh_ref[0][None, :]), 0.0)
    for l in range(3):
        h = jnp.maximum(
            linear(h.astype(jnp.bfloat16), w_sh_ref[l], b_sh_ref[l + 1][None, :]),
            0.0)

    # ---- unshared branch for this tile's domain: 3x Linear+ReLU, then Linear
    for l in range(3):
        h = jnp.maximum(
            linear(h.astype(jnp.bfloat16), w_un_ref[0, l],
                   b_un_ref[0, l][None, :]), 0.0)
    out = linear(h.astype(jnp.bfloat16), w_un_ref[0, 3], b_un_ref[0, 3][None, :])
    out_ref[...] = out.astype(out_ref.dtype)


def mapping_network(z, y, params, num_domains, max_tile_b=256):
    """z: (B, latent_dim) f32, y: (B,) int in [0, num_domains) -> s: (B, style_dim) f32."""
    w_in, b_in, w_sh, b_sh, w_un, b_un = params
    B, latent_dim = z.shape
    style = w_in.shape[1]
    D = num_domains

    # ---- batch tile: multiple of 16 (bf16 min sublane tile), capped at 256.
    T = min(max_tile_b, max(16, ((B + 15) // 16) * 16))
    if D == 1 and B > 32:
        # keep >= 2 tiles so both v7x TensorCores get work (automatic for D >= 2)
        T = min(T, max(16, (((B // 2) + 15) // 16) * 16))
    # static upper bound on sum_d ceil(count_d / T)
    num_tiles = B // T + D
    rows = num_tiles * T

    # ---- pack / cast parameters: bf16 weights, f32 biases, lane-dense latent
    L_pad = ((latent_dim + 127) // 128) * 128
    L_pad = max(L_pad, 128)
    w_in_p = jnp.zeros((L_pad, style), jnp.bfloat16).at[:latent_dim].set(
        w_in.astype(jnp.bfloat16))                                   # (L_pad, S)
    w_sh_bf = w_sh.astype(jnp.bfloat16)                              # (3, S, S)
    b_shared = jnp.concatenate([b_in[None, :], b_sh], axis=0)        # (4, S) f32
    w_un_bf = w_un.astype(jnp.bfloat16)                              # (D, 4, S, S)
    b_un_f = b_un.astype(jnp.float32)                                # (D, 4, S)

    # ---- MoE-style grouping: sort rows by domain; each tile is single-domain.
    y32 = y.astype(jnp.int32)
    dom_iota = jnp.arange(D, dtype=jnp.int32)
    counts = jnp.sum((y32[:, None] == dom_iota[None, :]).astype(jnp.int32),
                     axis=0)                                         # (D,)
    tiles_per = (counts + T - 1) // T                                # (D,)
    tile_start = jnp.concatenate(
        [jnp.zeros((1,), jnp.int32), jnp.cumsum(tiles_per).astype(jnp.int32)])
    row_start = jnp.concatenate(
        [jnp.zeros((1,), jnp.int32), jnp.cumsum(counts).astype(jnp.int32)])
    order = jnp.argsort(y32)                                         # (B,) rows sorted by domain

    # per-tile domain id (trailing unused tiles clamp to a valid domain; all of
    # their rows are zero padding and their output slots are never read back)
    t_ids = jnp.arange(num_tiles, dtype=jnp.int32)
    tile_dom = jnp.minimum(
        jnp.sum((t_ids[:, None] >= tile_start[1:][None, :]).astype(jnp.int32),
                axis=1),
        D - 1).astype(jnp.int32)                                     # (num_tiles,)

    # per-slot source row index (B == zero-padding row)
    j_ids = jnp.arange(T, dtype=jnp.int32)
    lr = (t_ids - tile_start[tile_dom])[:, None] * T + j_ids[None, :]   # (num_tiles, T)
    valid = lr < counts[tile_dom][:, None]
    p = row_start[tile_dom][:, None] + lr
    src = jnp.where(valid, order[jnp.clip(p, 0, max(B - 1, 0))], B)     # (num_tiles, T)
    flat_src = src.reshape(rows)

    z_pad = jnp.concatenate(
        [z.astype(jnp.bfloat16), jnp.zeros((1, latent_dim), jnp.bfloat16)],
        axis=0)                                                       # (B+1, L)
    z_pad = jnp.pad(z_pad, ((0, 0), (0, L_pad - latent_dim)))         # (B+1, L_pad)
    z_grp = z_pad[flat_src]                                           # (rows, L_pad)

    # inverse map: the grouped slot that holds each original row
    rank = jnp.argsort(order)                                         # sorted position of row i
    lr_i = rank - row_start[y32]
    slot = (tile_start[y32] + lr_i // T) * T + lr_i % T               # (B,)

    grid_spec = pltpu.PrefetchScalarGridSpec(
        num_scalar_prefetch=1,
        grid=(num_tiles,),
        in_specs=[
            pl.BlockSpec((T, L_pad), lambda i, dom: (i, 0)),             # grouped z
            pl.BlockSpec((L_pad, style), lambda i, dom: (0, 0)),         # w_in
            pl.BlockSpec((4, style), lambda i, dom: (0, 0)),             # shared biases
            pl.BlockSpec((3, style, style), lambda i, dom: (0, 0, 0)),   # shared weights
            pl.BlockSpec((1, 4, style, style),
                         lambda i, dom: (dom[i], 0, 0, 0)),              # this tile's unshared W
            pl.BlockSpec((1, 4, style), lambda i, dom: (dom[i], 0, 0)),  # this tile's unshared b
        ],
        out_specs=pl.BlockSpec((T, style), lambda i, dom: (i, 0)),
    )

    cost = pl.CostEstimate(
        flops=2 * rows * (L_pad * style + 7 * style * style),
        transcendentals=0,
        bytes_accessed=int(
            2 * (w_in_p.size + w_sh_bf.size + w_un_bf.size)   # bf16 weights
            + 4 * (b_shared.size + b_un_f.size)               # f32 biases
            + 2 * rows * L_pad + 4 * rows * style),           # activations in/out
    )

    out_grp = pl.pallas_call(
        mapping_kernel,
        out_shape=jax.ShapeDtypeStruct((rows, style), jnp.float32),
        grid_spec=grid_spec,
        compiler_params=pltpu.CompilerParams(
            dimension_semantics=("parallel",)),
        cost_estimate=cost,
    )(tile_dom, z_grp, w_in_p, b_shared, w_sh_bf, w_un_bf, b_un_f)

    return out_grp[slot]


def init_params(key, latent_dim, style_dim, num_domains):
    ks = jax.random.split(key, 6)
    scale = 0.05
    w_in = scale * jax.random.normal(ks[0], (latent_dim, style_dim), jnp.float32)
    b_in = scale * jax.random.normal(ks[1], (style_dim,), jnp.float32)
    w_sh = scale * jax.random.normal(ks[2], (3, style_dim, style_dim), jnp.float32)
    b_sh = scale * jax.random.normal(ks[3], (3, style_dim), jnp.float32)
    w_un = scale * jax.random.normal(
        ks[4], (num_domains, 4, style_dim, style_dim), jnp.float32)
    b_un = scale * jax.random.normal(
        ks[5], (num_domains, 4, style_dim), jnp.float32)
    return (w_in, b_in, w_sh, b_sh, w_un, b_un)


def mapping_network_ref(z, y, params, num_domains):
    """Pure-JAX f32 reference mirroring the PyTorch forward."""
    w_in, b_in, w_sh, b_sh, w_un, b_un = params
    h = jnp.maximum(z @ w_in + b_in, 0.0)
    for l in range(3):
        h = jnp.maximum(h @ w_sh[l] + b_sh[l], 0.0)
    outs = []
    for d in range(num_domains):
        hd = h
        for l in range(3):
            hd = jnp.maximum(hd @ w_un[d, l] + b_un[d, l], 0.0)
        hd = hd @ w_un[d, 3] + b_un[d, 3]
        outs.append(hd)
    out = jnp.stack(outs, axis=1)                 # (B, num_domains, style)
    return out[jnp.arange(z.shape[0]), y]         # (B, style)


if __name__ == "__main__":
    latent_dim, style_dim, num_domains = 16, 128, 3
    B = 8

    key = jax.random.PRNGKey(0)
    k_p, k_z, k_y = jax.random.split(key, 3)
    params = init_params(k_p, latent_dim, style_dim, num_domains)
    z = jax.random.normal(k_z, (B, latent_dim), jnp.float32)
    # NOTE: contract matches PyTorch: y must lie in [0, num_domains).
    y = jax.random.randint(k_y, (B,), 0, num_domains, jnp.int32)

    s = mapping_network(z, y, params, num_domains)
    s = jax.block_until_ready(s)

    s_ref = mapping_network_ref(z, y, params, num_domains)
    assert s.shape == (B, style_dim)
    # bf16 matmuls with f32 accumulation -> relaxed tolerance vs f32 reference.
    assert jnp.allclose(s, s_ref, atol=2e-2, rtol=5e-2), "mismatch vs reference"

    print("KERNEL_OK")
</pallas_src>

<mosaic_0001>
module attributes {stable_mosaic.version = 11 : i64} {
  func.func @mapping_kernel(%arg0: i32, %arg1: memref<3xi32, #tpu.memory_space<smem>>, %arg2: memref<16x128xbf16, #tpu.memory_space<vmem>>, %arg3: memref<128x128xbf16, #tpu.memory_space<vmem>>, %arg4: memref<4x128xf32, #tpu.memory_space<vmem>>, %arg5: memref<3x128x128xbf16, #tpu.memory_space<vmem>>, %arg6: memref<1x4x128x128xbf16, #tpu.memory_space<vmem>>, %arg7: memref<1x4x128xf32, #tpu.memory_space<vmem>>, %arg8: memref<16x128xf32, #tpu.memory_space<vmem>>) attributes {dimension_semantics = [#tpu.dimension_semantics<parallel>], iteration_bounds = array<i64: 3>, scalar_prefetch = 1 : i64, scratch_operands = 0 : i64, tpu.core_type = #tpu.core_type<tc>, window_params = [{transform_indices = @transform_0, window_bounds = array<i64: 16, 128>}, {pipeline_mode = #tpu.pipeline_mode<synchronous>, transform_indices = @transform_1, window_bounds = array<i64: 128, 128>}, {pipeline_mode = #tpu.pipeline_mode<synchronous>, transform_indices = @transform_2, window_bounds = array<i64: 4, 128>}, {pipeline_mode = #tpu.pipeline_mode<synchronous>, transform_indices = @transform_3, window_bounds = array<i64: 3, 128, 128>}, {transform_indices = @transform_4, window_bounds = array<i64: 1, 4, 128, 128>}, {transform_indices = @transform_5, window_bounds = array<i64: 1, 4, 128>}, {transform_indices = @transform_6, window_bounds = array<i64: 16, 128>}]} {
    %c0 = arith.constant 0 : index
    %c0_0 = arith.constant 0 : index
    %0 = vector.load %arg2[%c0, %c0_0] : memref<16x128xbf16, #tpu.memory_space<vmem>>, vector<16x128xbf16>
    %c0_1 = arith.constant 0 : index
    %c0_2 = arith.constant 0 : index
    %1 = vector.load %arg3[%c0_1, %c0_2] : memref<128x128xbf16, #tpu.memory_space<vmem>>, vector<128x128xbf16>
    %c0_3 = arith.constant 0 : index
    %c0_4 = arith.constant 0 : index
    %2 = vector.load %arg4[%c0_3, %c0_4] : memref<4x128xf32, #tpu.memory_space<vmem>>, vector<1x128xf32>
    %3 = vector.shape_cast %2 : vector<1x128xf32> to vector<128xf32>
    %4 = vector.shape_cast %3 : vector<128xf32> to vector<1x128xf32>
    %cst = arith.constant dense<0.000000e+00> : vector<16x128xf32>
    %5 = tpu.matmul %0, %1, %cst {dimension_numbers = #tpu.dot_dimension_numbers<[1], [0], [0], [1], [0, 0, 1, 1], [], []>} : vector<16x128xbf16>, vector<128x128xbf16>, vector<16x128xf32> -> vector<16x128xf32>
    %6 = vector.broadcast %4 : vector<1x128xf32> to vector<16x128xf32>
    %7 = arith.addf %5, %6 : vector<16x128xf32>
    %cst_5 = arith.constant 0.000000e+00 : f32
    %8 = vector.broadcast %cst_5 : f32 to vector<16x128xf32>
    %9 = arith.maximumf %7, %8 : vector<16x128xf32>
    %10 = arith.truncf %9 : vector<16x128xf32> to vector<16x128xbf16>
    %c0_6 = arith.constant 0 : index
    %c0_7 = arith.constant 0 : index
    %c0_8 = arith.constant 0 : index
    %11 = vector.load %arg5[%c0_6, %c0_7, %c0_8] : memref<3x128x128xbf16, #tpu.memory_space<vmem>>, vector<1x128x128xbf16>
    %12 = vector.shape_cast %11 : vector<1x128x128xbf16> to vector<128x128xbf16>
    %c1 = arith.constant 1 : index
    %c0_9 = arith.constant 0 : index
    %13 = vector.load %arg4[%c1, %c0_9] : memref<4x128xf32, #tpu.memory_space<vmem>>, vector<1x128xf32>
    %14 = vector.shape_cast %13 : vector<1x128xf32> to vector<128xf32>
    %15 = vector.shape_cast %14 : vector<128xf32> to vector<1x128xf32>
    %cst_10 = arith.constant dense<0.000000e+00> : vector<16x128xf32>
    %16 = tpu.matmul %10, %12, %cst_10 {dimension_numbers = #tpu.dot_dimension_numbers<[1], [0], [0], [1], [0, 0, 1, 1], [], []>} : vector<16x128xbf16>, vector<128x128xbf16>, vector<16x128xf32> -> vector<16x128xf32>
    %17 = vector.broadcast %15 : vector<1x128xf32> to vector<16x128xf32>
    %18 = arith.addf %16, %17 : vector<16x128xf32>
    %cst_11 = arith.constant 0.000000e+00 : f32
    %19 = vector.broadcast %cst_11 : f32 to vector<16x128xf32>
    %20 = arith.maximumf %18, %19 : vector<16x128xf32>
    %21 = arith.truncf %20 : vector<16x128xf32> to vector<16x128xbf16>
    %c1_12 = arith.constant 1 : index
    %c0_13 = arith.constant 0 : index
    %c0_14 = arith.constant 0 : index
    %22 = vector.load %arg5[%c1_12, %c0_13, %c0_14] : memref<3x128x128xbf16, #tpu.memory_space<vmem>>, vector<1x128x128xbf16>
    %23 = vector.shape_cast %22 : vector<1x128x128xbf16> to vector<128x128xbf16>
    %c2 = arith.constant 2 : index
    %c0_15 = arith.constant 0 : index
    %24 = vector.load %arg4[%c2, %c0_15] : memref<4x128xf32, #tpu.memory_space<vmem>>, vector<1x128xf32>
    %25 = vector.shape_cast %24 : vector<1x128xf32> to vector<128xf32>
    %26 = vector.shape_cast %25 : vector<128xf32> to vector<1x128xf32>
    %cst_16 = arith.constant dense<0.000000e+00> : vector<16x128xf32>
    %27 = tpu.matmul %21, %23, %cst_16 {dimension_numbers = #tpu.dot_dimension_numbers<[1], [0], [0], [1], [0, 0, 1, 1], [], []>} : vector<16x128xbf16>, vector<128x128xbf16>, vector<16x128xf32> -> vector<16x128xf32>
    %28 = vector.broadcast %26 : vector<1x128xf32> to vector<16x128xf32>
    %29 = arith.addf %27, %28 : vector<16x128xf32>
    %cst_17 = arith.constant 0.000000e+00 : f32
    %30 = vector.broadcast %cst_17 : f32 to vector<16x128xf32>
    %31 = arith.maximumf %29, %30 : vector<16x128xf32>
    %32 = arith.truncf %31 : vector<16x128xf32> to vector<16x128xbf16>
    %c2_18 = arith.constant 2 : index
    %c0_19 = arith.constant 0 : index
    %c0_20 = arith.constant 0 : index
    %33 = vector.load %arg5[%c2_18, %c0_19, %c0_20] : memref<3x128x128xbf16, #tpu.memory_space<vmem>>, vector<1x128x128xbf16>
    %34 = vector.shape_cast %33 : vector<1x128x128xbf16> to vector<128x128xbf16>
    %c3 = arith.constant 3 : index
    %c0_21 = arith.constant 0 : index
    %35 = vector.load %arg4[%c3, %c0_21] : memref<4x128xf32, #tpu.memory_space<vmem>>, vector<1x128xf32>
    %36 = vector.shape_cast %35 : vector<1x128xf32> to vector<128xf32>
    %37 = vector.shape_cast %36 : vector<128xf32> to vector<1x128xf32>
    %cst_22 = arith.constant dense<0.000000e+00> : vector<16x128xf32>
    %38 = tpu.matmul %32, %34, %cst_22 {dimension_numbers = #tpu.dot_dimension_numbers<[1], [0], [0], [1], [0, 0, 1, 1], [], []>} : vector<16x128xbf16>, vector<128x128xbf16>, vector<16x128xf32> -> vector<16x128xf32>
    %39 = vector.broadcast %37 : vector<1x128xf32> to vector<16x128xf32>
    %40 = arith.addf %38, %39 : vector<16x128xf32>
    %cst_23 = arith.constant 0.000000e+00 : f32
    %41 = vector.broadcast %cst_23 : f32 to vector<16x128xf32>
    %42 = arith.maximumf %40, %41 : vector<16x128xf32>
    %43 = arith.truncf %42 : vector<16x128xf32> to vector<16x128xbf16>
    %c0_24 = arith.constant 0 : index
    %c0_25 = arith.constant 0 : index
    %c0_26 = arith.constant 0 : index
    %c0_27 = arith.constant 0 : index
    %44 = vector.load %arg6[%c0_24, %c0_25, %c0_26, %c0_27] : memref<1x4x128x128xbf16, #tpu.memory_space<vmem>>, vector<1x1x128x128xbf16>
    %45 = vector.shape_cast %44 : vector<1x1x128x128xbf16> to vector<128x128xbf16>
    %c0_28 = arith.constant 0 : index
    %c0_29 = arith.constant 0 : index
    %c0_30 = arith.constant 0 : index
    %46 = vector.load %arg7[%c0_28, %c0_29, %c0_30] : memref<1x4x128xf32, #tpu.memory_space<vmem>>, vector<1x1x128xf32>
    %47 = vector.shape_cast %46 : vector<1x1x128xf32> to vector<128xf32>
    %48 = vector.shape_cast %47 : vector<128xf32> to vector<1x128xf32>
    %cst_31 = arith.constant dense<0.000000e+00> : vector<16x128xf32>
    %49 = tpu.matmul %43, %45, %cst_31 {dimension_numbers = #tpu.dot_dimension_numbers<[1], [0], [0], [1], [0, 0, 1, 1], [], []>} : vector<16x128xbf16>, vector<128x128xbf16>, vector<16x128xf32> -> vector<16x128xf32>
    %50 = vector.broadcast %48 : vector<1x128xf32> to vector<16x128xf32>
    %51 = arith.addf %49, %50 : vector<16x128xf32>
    %cst_32 = arith.constant 0.000000e+00 : f32
    %52 = vector.broadcast %cst_32 : f32 to vector<16x128xf32>
    %53 = arith.maximumf %51, %52 : vector<16x128xf32>
    %54 = arith.truncf %53 : vector<16x128xf32> to vector<16x128xbf16>
    %c0_33 = arith.constant 0 : index
    %c1_34 = arith.constant 1 : index
    %c0_35 = arith.constant 0 : index
    %c0_36 = arith.constant 0 : index
    %55 = vector.load %arg6[%c0_33, %c1_34, %c0_35, %c0_36] : memref<1x4x128x128xbf16, #tpu.memory_space<vmem>>, vector<1x1x128x128xbf16>
    %56 = vector.shape_cast %55 : vector<1x1x128x128xbf16> to vector<128x128xbf16>
    %c0_37 = arith.constant 0 : index
    %c1_38 = arith.constant 1 : index
    %c0_39 = arith.constant 0 : index
    %57 = vector.load %arg7[%c0_37, %c1_38, %c0_39] : memref<1x4x128xf32, #tpu.memory_space<vmem>>, vector<1x1x128xf32>
    %58 = vector.shape_cast %57 : vector<1x1x128xf32> to vector<128xf32>
    %59 = vector.shape_cast %58 : vector<128xf32> to vector<1x128xf32>
    %cst_40 = arith.constant dense<0.000000e+00> : vector<16x128xf32>
    %60 = tpu.matmul %54, %56, %cst_40 {dimension_numbers = #tpu.dot_dimension_numbers<[1], [0], [0], [1], [0, 0, 1, 1], [], []>} : vector<16x128xbf16>, vector<128x128xbf16>, vector<16x128xf32> -> vector<16x128xf32>
    %61 = vector.broadcast %59 : vector<1x128xf32> to vector<16x128xf32>
    %62 = arith.addf %60, %61 : vector<16x128xf32>
    %cst_41 = arith.constant 0.000000e+00 : f32
    %63 = vector.broadcast %cst_41 : f32 to vector<16x128xf32>
    %64 = arith.maximumf %62, %63 : vector<16x128xf32>
    %65 = arith.truncf %64 : vector<16x128xf32> to vector<16x128xbf16>
    %c0_42 = arith.constant 0 : index
    %c2_43 = arith.constant 2 : index
    %c0_44 = arith.constant 0 : index
    %c0_45 = arith.constant 0 : index
    %66 = vector.load %arg6[%c0_42, %c2_43, %c0_44, %c0_45] : memref<1x4x128x128xbf16, #tpu.memory_space<vmem>>, vector<1x1x128x128xbf16>
    %67 = vector.shape_cast %66 : vector<1x1x128x128xbf16> to vector<128x128xbf16>
    %c0_46 = arith.constant 0 : index
    %c2_47 = arith.constant 2 : index
    %c0_48 = arith.constant 0 : index
    %68 = vector.load %arg7[%c0_46, %c2_47, %c0_48] : memref<1x4x128xf32, #tpu.memory_space<vmem>>, vector<1x1x128xf32>
    %69 = vector.shape_cast %68 : vector<1x1x128xf32> to vector<128xf32>
    %70 = vector.shape_cast %69 : vector<128xf32> to vector<1x128xf32>
    %cst_49 = arith.constant dense<0.000000e+00> : vector<16x128xf32>
    %71 = tpu.matmul %65, %67, %cst_49 {dimension_numbers = #tpu.dot_dimension_numbers<[1], [0], [0], [1], [0, 0, 1, 1], [], []>} : vector<16x128xbf16>, vector<128x128xbf16>, vector<16x128xf32> -> vector<16x128xf32>
    %72 = vector.broadcast %70 : vector<1x128xf32> to vector<16x128xf32>
    %73 = arith.addf %71, %72 : vector<16x128xf32>
    %cst_50 = arith.constant 0.000000e+00 : f32
    %74 = vector.broadcast %cst_50 : f32 to vector<16x128xf32>
    %75 = arith.maximumf %73, %74 : vector<16x128xf32>
    %76 = arith.truncf %75 : vector<16x128xf32> to vector<16x128xbf16>
    %c0_51 = arith.constant 0 : index
    %c3_52 = arith.constant 3 : index
    %c0_53 = arith.constant 0 : index
    %c0_54 = arith.constant 0 : index
    %77 = vector.load %arg6[%c0_51, %c3_52, %c0_53, %c0_54] : memref<1x4x128x128xbf16, #tpu.memory_space<vmem>>, vector<1x1x128x128xbf16>
    %78 = vector.shape_cast %77 : vector<1x1x128x128xbf16> to vector<128x128xbf16>
    %c0_55 = arith.constant 0 : index
    %c3_56 = arith.constant 3 : index
    %c0_57 = arith.constant 0 : index
    %79 = vector.load %arg7[%c0_55, %c3_56, %c0_57] : memref<1x4x128xf32, #tpu.memory_space<vmem>>, vector<1x1x128xf32>
    %80 = vector.shape_cast %79 : vector<1x1x128xf32> to vector<128xf32>
    %81 = vector.shape_cast %80 : vector<128xf32> to vector<1x128xf32>
    %cst_58 = arith.constant dense<0.000000e+00> : vector<16x128xf32>
    %82 = tpu.matmul %76, %78, %cst_58 {dimension_numbers = #tpu.dot_dimension_numbers<[1], [0], [0], [1], [0, 0, 1, 1], [], []>} : vector<16x128xbf16>, vector<128x128xbf16>, vector<16x128xf32> -> vector<16x128xf32>
    %83 = vector.broadcast %81 : vector<1x128xf32> to vector<16x128xf32>
    %84 = arith.addf %82, %83 : vector<16x128xf32>
    %c0_59 = arith.constant 0 : index
    %c0_60 = arith.constant 0 : index
    %85 = vector.load %arg8[%c0_59, %c0_60] : memref<16x128xf32, #tpu.memory_space<vmem>>, vector<16x128xf32>
    tpu.vector_store %arg8[%c0_59, %c0_60], %84 {strides = array<i32>} : memref<16x128xf32, #tpu.memory_space<vmem>>, vector<16x128xf32>,
    return
  }
  func.func @transform_0(%arg0: i32, %arg1: memref<3xi32, #tpu.memory_space<smem>>) -> (i32, i32) {
    %c0_i32 = arith.constant 0 : i32
    %c0_i32_0 = arith.constant 0 : i32
    return %arg0, %c0_i32 : i32, i32
  }
  func.func @transform_1(%arg0: i32, %arg1: memref<3xi32, #tpu.memory_space<smem>>) -> (i32, i32) {
    %c0_i32 = arith.constant 0 : i32
    %c0_i32_0 = arith.constant 0 : i32
    %c0_i32_1 = arith.constant 0 : i32
    return %c0_i32, %c0_i32_0 : i32, i32
  }
  func.func @transform_2(%arg0: i32, %arg1: memref<3xi32, #tpu.memory_space<smem>>) -> (i32, i32) {
    %c0_i32 = arith.constant 0 : i32
    %c0_i32_0 = arith.constant 0 : i32
    %c0_i32_1 = arith.constant 0 : i32
    return %c0_i32, %c0_i32_0 : i32, i32
  }
  func.func @transform_3(%arg0: i32, %arg1: memref<3xi32, #tpu.memory_space<smem>>) -> (i32, i32, i32) {
    %c0_i32 = arith.constant 0 : i32
    %c0_i32_0 = arith.constant 0 : i32
    %c0_i32_1 = arith.constant 0 : i32
    %c0_i32_2 = arith.constant 0 : i32
    return %c0_i32, %c0_i32_0, %c0_i32_1 : i32, i32, i32
  }
  func.func @transform_4(%arg0: i32, %arg1: memref<3xi32, #tpu.memory_space<smem>>) -> (i32, i32, i32, i32) {
    %0 = arith.index_cast %arg0 : i32 to index
    %1 = memref.load %arg1[%0] : memref<3xi32, #tpu.memory_space<smem>>
    %c0_i32 = arith.constant 0 : i32
    %c0_i32_0 = arith.constant 0 : i32
    %c0_i32_1 = arith.constant 0 : i32
    %c0_i32_2 = arith.constant 0 : i32
    return %1, %c0_i32, %c0_i32_0, %c0_i32_1 : i32, i32, i32, i32
  }
  func.func @transform_5(%arg0: i32, %arg1: memref<3xi32, #tpu.memory_space<smem>>) -> (i32, i32, i32) {
    %0 = arith.index_cast %arg0 : i32 to index
    %1 = memref.load %arg1[%0] : memref<3xi32, #tpu.memory_space<smem>>
    %c0_i32 = arith.constant 0 : i32
    %c0_i32_0 = arith.constant 0 : i32
    %c0_i32_1 = arith.constant 0 : i32
    return %1, %c0_i32, %c0_i32_0 : i32, i32, i32
  }
  func.func @transform_6(%arg0: i32, %arg1: memref<3xi32, #tpu.memory_space<smem>>) -> (i32, i32) {
    %c0_i32 = arith.constant 0 : i32
    %c0_i32_0 = arith.constant 0 : i32
    return %arg0, %c0_i32 : i32, i32
  }
}

</mosaic_0001>

<llo_original>
// kernel: tpu_custom_call.1
$region0: #{tpu_custom_call.1}
  #allocation0 [shape = 'u32[]', space=smem, size = 0x4, offset = 0x4, fixed_abs, tag = 'smem constant byte address 0x4 - core index']
  #allocation1 [shape = 'u32[144,128]{1,0:T(1,128)}', space=vmem, size = 0x12000, scoped, tag = 'internal scratch']
  #allocation2 [shape = 's32[1]{0}', space=sflag, size = 0x4, scoped, tag = 'scoped memory for tpu_custom_call.1']
  #allocation3 [shape = 'u8[512]{0}', space=smem, size = 0x200, scoped, tag = 'prefetched SMEM operand 0']
  %s0 = inlined_call_operand.hbm [shape: s32[3], index: 0, kind: input, shape index: {}]
  %s1 = inlined_call_operand.hbm [shape: bf16[48,128], index: 1, kind: input, shape index: {}]
  %s2 = inlined_call_operand.hbm [shape: bf16[128,128], index: 2, kind: input, shape index: {}]
  %s3 = inlined_call_operand.vmem [shape: f32[4,128], index: 3, kind: input, shape index: {}]
  %s4 = inlined_call_operand.hbm [shape: bf16[3,128,128], index: 4, kind: input, shape index: {}]
  %s5 = inlined_call_operand.hbm [shape: bf16[3,4,128,128], index: 5, kind: input, shape index: {}]
  %s6 = inlined_call_operand.hbm [shape: f32[3,4,128], index: 6, kind: input, shape index: {}]
  %s7 = inlined_call_operand.hbm [shape: f32[48,128], index: 7, kind: output, shape index: {}]
  %s8 = sld [smem:[#allocation0]]
  $region77: #{tpu_custom_call.1} parent=0
    _
  %s10 = ssub.s32 1, %s8
  %s11 = scalar_select 0, %s10, %s8
  %13 = dma.hbm_to_smem %s0, 16, [#allocation3], [#allocation2]
  %14 = dma.done [#allocation2], 16
  %15 = sfence
  $region1: #{tpu_custom_call.1} parent=0
    #allocation4 [shape = 'u8[8192]{0}', space=vmem, size = 0x2000, scoped, tag = 'input window, operand 1']
    #allocation5 [shape = 's32[2]{0}', space=sflag, size = 0x8, scoped, tag = 'scoped memory for tpu_custom_call.1']
    #allocation6 [shape = 's32[2]{0}', space=sflag, size = 0x8, scoped, tag = 'scoped memory for tpu_custom_call.1']
    #allocation7 [shape = 'u8[32768]{0}', space=vmem, size = 0x8000, scoped, tag = 'input window, operand 2, single buffered']
    #allocation8 [shape = 's32[1]{0}', space=sflag, size = 0x4, scoped, tag = 'scoped memory for tpu_custom_call.1']
    #allocation9 [shape = 'u8[98304]{0}', space=vmem, size = 0x18000, scoped, tag = 'input window, operand 4, single buffered']
    #allocation10 [shape = 'u8[262144]{0}', space=vmem, size = 0x40000, scoped, tag = 'input window, operand 5']
    #allocation11 [shape = 's32[2]{0}', space=sflag, size = 0x8, scoped, tag = 'scoped memory for tpu_custom_call.1']
    #allocation12 [shape = 'u8[4096]{0}', space=vmem, size = 0x1000, scoped, tag = 'input window, operand 6']
    #allocation13 [shape = 'u8[16384]{0}', space=vmem, size = 0x4000, scoped, tag = 'output window, operand 0']
    %16 = vsyncpa [#allocation5], 0
    %s17 = scalar_lea.sflag [#allocation5], 1
    %18 = vsyncpa %s17, 0
    %19 = vsyncpa [#allocation8], 0
    %20 = vsyncpa [#allocation11], 0
    %s21 = scalar_lea.sflag [#allocation11], 1
    %22 = vsyncpa %s21, 0
    %23 = vsyncpa [#allocation6], 0
    %s24 = scalar_lea.sflag [#allocation6], 1
    %25 = vsyncpa %s24, 0
    loop: start=0, step=1, limit=5
    $region2: #{tpu_custom_call.1} parent=1 // loop_pre_header
      _
    $region3: #{tpu_custom_call.1} parent=1 // loop_header
      %s27 = sphi 0, %s31
      %p28 = scmp.ge.s32.totalorder %s27, 5
      %s37 = sphi 0, %s39
      %s40 = sphi 0, %s37
      %s41 = sphi 0, %s40
      %s57 = sphi 0, %s41
      %s61 = sphi 0, %s61
      %s63 = sphi 0, %s61
      %s64 = sphi 0, %s63
      %s78 = sphi 0, %s64
      %s82 = sphi 0, %s82
      %s84 = sphi 0, %s82
      %s85 = sphi 0, %s84
      %s99 = sphi 0, %s85
      %s103 = sphi 0, %s103
      %s105 = sphi 0, %s103
      %s106 = sphi 0, %s105
      %s120 = sphi 0, %s106
      %s128 = sphi 0, %s130
      %s131 = sphi 0, %s128
      %s132 = sphi 0, %s131
      %s148 = sphi 0, %s132
      %s156 = sphi 0, %s158
      %s159 = sphi 0, %s156
      %s160 = sphi 0, %s159
      %s176 = sphi 0, %s160
      %s182 = sphi 0, %s184
      %s185 = sphi 0, %s182
      %s186 = sphi 0, %s185
      %s202 = sphi 0, %s186
    $region4: #{tpu_custom_call.1} parent=1 // loop_header_branch
      %30 = sbr.rel (%p28) target = $region8
    $region5: #{tpu_custom_call.1} parent=1 // loop_body
      %s32 = ssub.s32 %s27, 1
      %s33 = ssub.s32 %s27, 2
      %s34 = sadd.s32 %s27, 1
      %s35 = ssub.s32 %s27, %s34
      %p36 = scmp.eq.s32.totalorder %s35, 0
      %s38 = sadd.s32 %s37, 1
      %s39 = scalar_select %p36, %s37, %s38
      %p42 = pneg %p36
      %p43 = scmp.eq.s32.totalorder %s27, 2
      %p44 = por %p42, %p43
      %p45 = scmp.ne.s32.totalorder %s37, %s40
      %p46 = scmp.eq.s32.totalorder %s27, 0
      %p47 = por %p45, %p46
      %p48 = scmp.ne.s32.totalorder %s37, %s40
      %p49 = scmp.eq.s32.totalorder %s32, 2
      %p50 = por %p48, %p49
      %p51 = scmp.ne.s32.totalorder %s40, %s41
      %p52 = scmp.eq.s32.totalorder %s32, 0
      %p53 = por %p51, %p52
      %p54 = scmp.ne.s32.totalorder %s40, %s41
      %p55 = scmp.eq.s32.totalorder %s33, 2
      %p56 = por %p54, %p55
      %p58 = scmp.ne.s32.totalorder %s41, %s57
      %p59 = scmp.eq.s32.totalorder %s33, 0
      %p60 = por %p58, %p59
      %s62 = sadd.s32 %s61, 1
      %p65 = scmp.eq.s32.totalorder %s27, 2
      %p66 = scmp.ne.s32.totalorder %s61, %s63
      %p67 = scmp.eq.s32.totalorder %s27, 0
      %p68 = por %p66, %p67
      %p69 = scmp.ne.s32.totalorder %s61, %s63
      %p70 = scmp.eq.s32.totalorder %s32, 2
      %p71 = por %p69, %p70
      %p72 = scmp.ne.s32.totalorder %s63, %s64
      %p73 = scmp.eq.s32.totalorder %s32, 0
      %p74 = por %p72, %p73
      %p75 = scmp.ne.s32.totalorder %s63, %s64
      %p76 = scmp.eq.s32.totalorder %s33, 2
      %p77 = por %p75, %p76
      %p79 = scmp.ne.s32.totalorder %s64, %s78
      %p80 = scmp.eq.s32.totalorder %s33, 0
      %p81 = por %p79, %p80
      %s83 = sadd.s32 %s82, 1
      %p86 = scmp.eq.s32.totalorder %s27, 2
      %p87 = scmp.ne.s32.totalorder %s82, %s84
      %p88 = scmp.eq.s32.totalorder %s27, 0
      %p89 = por %p87, %p88
      %p90 = scmp.ne.s32.totalorder %s82, %s84
      %p91 = scmp.eq.s32.totalorder %s32, 2
      %p92 = por %p90, %p91
      %p93 = scmp.ne.s32.totalorder %s84, %s85
      %p94 = scmp.eq.s32.totalorder %s32, 0
      %p95 = por %p93, %p94
      %p96 = scmp.ne.s32.totalorder %s84, %s85
      %p97 = scmp.eq.s32.totalorder %s33, 2
      %p98 = por %p96, %p97
      %p100 = scmp.ne.s32.totalorder %s85, %s99
      %p101 = scmp.eq.s32.totalorder %s33, 0
      %p102 = por %p100, %p101
      %s104 = sadd.s32 %s103, 1
      %p107 = scmp.eq.s32.totalorder %s27, 2
      %p108 = scmp.ne.s32.totalorder %s103, %s105
      %p109 = scmp.eq.s32.totalorder %s27, 0
      %p110 = por %p108, %p109
      %p111 = scmp.ne.s32.totalorder %s103, %s105
      %p112 = scmp.eq.s32.totalorder %s32, 2
      %p113 = por %p111, %p112
      %p114 = scmp.ne.s32.totalorder %s105, %s106
      %p115 = scmp.eq.s32.totalorder %s32, 0
      %p116 = por %p114, %p115
      %p117 = scmp.ne.s32.totalorder %s105, %s106
      %p118 = scmp.eq.s32.totalorder %s33, 2
      %p119 = por %p117, %p118
      %p121 = scmp.ne.s32.totalorder %s106, %s120
      %p122 = scmp.eq.s32.totalorder %s33, 0
      %p123 = por %p121, %p122
      %s124 = sld [smem:[#allocation3 + %s27]]
      %s125 = sld [smem:[#allocation3 + %s34]]
      %s126 = ssub.s32 %s124, %s125
      %p127 = scmp.eq.s32.totalorder %s126, 0
      %s129 = sadd.s32 %s128, 1
      %s130 = scalar_select %p127, %s128, %s129
      %p133 = pneg %p127
      %p134 = scmp.eq.s32.totalorder %s27, 2
      %p135 = por %p133, %p134
      %p136 = scmp.ne.s32.totalorder %s128, %s131
      %p137 = scmp.eq.s32.totalorder %s27, 0
      %p138 = por %p136, %p137
      %p139 = scmp.ne.s32.totalorder %s128, %s131
      %p140 = scmp.eq.s32.totalorder %s32, 2
      %p141 = por %p139, %p140
      %p142 = scmp.ne.s32.totalorder %s131, %s132
      %p143 = scmp.eq.s32.totalorder %s32, 0
      %p144 = por %p142, %p143
      %p145 = scmp.ne.s32.totalorder %s131, %s132
      %p146 = scmp.eq.s32.totalorder %s33, 2
      %p147 = por %p145, %p146
      %p149 = scmp.ne.s32.totalorder %s132, %s148
      %p150 = scmp.eq.s32.totalorder %s33, 0
      %p151 = por %p149, %p150
      %s152 = sld [smem:[#allocation3 + %s27]]
      %s153 = sld [smem:[#allocation3 + %s34]]
      %s154 = ssub.s32 %s152, %s153
      %p155 = scmp.eq.s32.totalorder %s154, 0
      %s157 = sadd.s32 %s156, 1
      %s158 = scalar_select %p155, %s156, %s157
      %p161 = pneg %p155
      %p162 = scmp.eq.s32.totalorder %s27, 2
      %p163 = por %p161, %p162
      %p164 = scmp.ne.s32.totalorder %s156, %s159
      %p165 = scmp.eq.s32.totalorder %s27, 0
      %p166 = por %p164, %p165
      %p167 = scmp.ne.s32.totalorder %s156, %s159
      %p168 = scmp.eq.s32.totalorder %s32, 2
      %p169 = por %p167, %p168
      %p170 = scmp.ne.s32.totalorder %s159, %s160
      %p171 = scmp.eq.s32.totalorder %s32, 0
      %p172 = por %p170, %p171
      %p173 = scmp.ne.s32.totalorder %s159, %s160
      %p174 = scmp.eq.s32.totalorder %s33, 2
      %p175 = por %p173, %p174
      %p177 = scmp.ne.s32.totalorder %s160, %s176
      %p178 = scmp.eq.s32.totalorder %s33, 0
      %p179 = por %p177, %p178
      %s180 = ssub.s32 %s27, %s34
      %p181 = scmp.eq.s32.totalorder %s180, 0
      %s183 = sadd.s32 %s182, 1
      %s184 = scalar_select %p181, %s182, %s183
      %p187 = pneg %p181
      %p188 = scmp.eq.s32.totalorder %s27, 2
      %p189 = por %p187, %p188
      %p190 = scmp.ne.s32.totalorder %s182, %s185
      %p191 = scmp.eq.s32.totalorder %s27, 0
      %p192 = por %p190, %p191
      %p193 = scmp.ne.s32.totalorder %s182, %s185
      %p194 = scmp.eq.s32.totalorder %s32, 2
      %p195 = por %p193, %p194
      %p196 = scmp.ne.s32.totalorder %s185, %s186
      %p197 = scmp.eq.s32.totalorder %s32, 0
      %p198 = por %p196, %p197
      %p199 = scmp.ne.s32.totalorder %s185, %s186
      %p200 = scmp.eq.s32.totalorder %s33, 2
      %p201 = por %p199, %p200
      %p203 = scmp.ne.s32.totalorder %s186, %s202
      %p204 = scmp.eq.s32.totalorder %s33, 0
      %p205 = por %p203, %p204
      %p206 = scmp.le.s32.totalorder 1, %s27
      %p207 = scmp.lt.s32.totalorder %s27, 4
      %p208 = pnand %p206, %p207
      %p209 = pneg %p208
      // Predicated region
      $region9: #{tpu_custom_call.1} parent=5 // pred_check
        _
      $region10: #{tpu_custom_call.1} parent=5 // pred_check_branch
        %211 = sbr.rel (%p208) target = $region12
      $region11: #{tpu_custom_call.1} parent=5 // pred_region
        %s212 = ssub.s32 %s27, 1
        // Predicated region
        $region13: #{tpu_custom_call.1} parent=11 // pred_check
          %p213 = pneg %p74
        $region14: #{tpu_custom_call.1} parent=11 // pred_check_branch
          %215 = sbr.rel (%p213) target = $region16
        $region15: #{tpu_custom_call.1} parent=11 // pred_region
          %s217 = ssub.s32 1024, 1024
          %218 = vsyncadd [#allocation8], %s217
          %s219 = sshll.u32 [#allocation7], 4
          %s220 = int_to_ptr.vmem [resolvable:$true] %s219
          %225 = dma.hbm_to_vmem [thread:$0]  %s2, 1024, %s220, [#allocation8], 64, 64, 4
        $region16: #{tpu_custom_call.1} parent=11 // pred_fallthru
          _
        // Predicated region
        $region17: #{tpu_custom_call.1} parent=11 // pred_check
          %p226 = pneg %p95
        $region18: #{tpu_custom_call.1} parent=11 // pred_check_branch
          %228 = sbr.rel (%p226) target = $region20
        $region19: #{tpu_custom_call.1} parent=11 // pred_region
          _
        $region20: #{tpu_custom_call.1} parent=11 // pred_fallthru
          _
        // Predicated region
        $region21: #{tpu_custom_call.1} parent=11 // pred_check
          %p229 = pneg %p116
        $region22: #{tpu_custom_call.1} parent=11 // pred_check_branch
          %231 = sbr.rel (%p229) target = $region24
        $region23: #{tpu_custom_call.1} parent=11 // pred_region
          %s233 = ssub.s32 3072, 3072
          %234 = vsyncadd [#allocation8], %s233
          %s235 = sshll.u32 [#allocation9], 4
          %s236 = int_to_ptr.vmem [resolvable:$true] %s235
          %241 = dma.hbm_to_vmem [thread:$0]  %s4, 3072, %s236, [#allocation8], 64, 64, 4
        $region24: #{tpu_custom_call.1} parent=11 // pred_fallthru
          _
      $region12: #{tpu_custom_call.1} parent=5 // pred_fallthru
        _
      %p242 = scmp.lt.s32.totalorder %s27, 3
      // Predicated region
      $region25: #{tpu_custom_call.1} parent=5 // pred_check
        %p243 = pneg %p242
      $region26: #{tpu_custom_call.1} parent=5 // pred_check_branch
        %245 = sbr.rel (%p243) target = $region28
      $region27: #{tpu_custom_call.1} parent=5 // pred_region
        // Predicated region
        $region29: #{tpu_custom_call.1} parent=27 // pred_check
          %p246 = pneg %p47
        $region30: #{tpu_custom_call.1} parent=27 // pred_check_branch
          %248 = sbr.rel (%p246) target = $region32
        $region31: #{tpu_custom_call.1} parent=27 // pred_region
          %s249 = sand.u32 %s37, 1
          %s250 = scalar_lea.sflag [#allocation5], %s249
          %s251 = sand.u32 %s37, 1
          %s252 = smul.addr %s251, 8
          %s253 = scalar_lea.vmem [#allocation4], %s252
          %s254 = smul.u32 2, %s27
          %s256 = ssub.s32 128, 128
          %257 = vsyncadd %s250, %s256
          %s258 = smul.addr %s254, 64
          %s259 = scalar_lea.hbm %s1, %s258
          %s260 = sshll.u32 %s253, 4
          %s261 = int_to_ptr.vmem [resolvable:$true] %s260
          %266 = dma.hbm_to_vmem [thread:$0]  %s259, 128, %s261, %s250, 64, 64, 4
        $region32: #{tpu_custom_call.1} parent=27 // pred_fallthru
          _
        // Predicated region
        $region33: #{tpu_custom_call.1} parent=27 // pred_check
          %p267 = pneg %p138
        $region34: #{tpu_custom_call.1} parent=27 // pred_check_branch
          %269 = sbr.rel (%p267) target = $region36
        $region35: #{tpu_custom_call.1} parent=27 // pred_region
          %s270 = sand.u32 %s27, 1
          %s271 = scalar_lea.sflag [#allocation11], %s270
          %s272 = sand.u32 %s128, 1
          %s273 = smul.addr %s272, 256
          %s274 = scalar_lea.vmem [#allocation10], %s273
          %s275 = sld [smem:[#allocation3 + %s27]]
          %s277 = ssub.s32 4096, 4096
          %278 = vsyncadd %s271, %s277
          %s279 = smul.addr %s275, 64
          %s280 = smul.addr %s279, 64
          %s281 = scalar_lea.hbm %s5, %s280
          %s282 = sshll.u32 %s274, 4
          %s283 = int_to_ptr.vmem [resolvable:$true] %s282
          %288 = dma.hbm_to_vmem [thread:$0]  %s281, 4096, %s283, %s271, 64, 64, 4
        $region36: #{tpu_custom_call.1} parent=27 // pred_fallthru
          _
        // Predicated region
        $region37: #{tpu_custom_call.1} parent=27 // pred_check
          %p289 = pneg %p166
        $region38: #{tpu_custom_call.1} parent=27 // pred_check_branch
          %291 = sbr.rel (%p289) target = $region40
        $region39: #{tpu_custom_call.1} parent=27 // pred_region
          %s292 = sand.u32 %s27, 1
          %s293 = scalar_lea.sflag [#allocation11], %s292
          %s294 = sand.u32 %s156, 1
          %s295 = smul.addr %s294, 4
          %s296 = scalar_lea.vmem [#allocation12], %s295
          %s297 = sld [smem:[#allocation3 + %s27]]
          %s299 = ssub.s32 64, 64
          %300 = vsyncadd %s293, %s299
          %s301 = smul.addr %s297, 64
          %s302 = scalar_lea.hbm %s6, %s301
          %s304 = sshll.u32 %s296, 4
          %s305 = int_to_ptr.vmem [resolvable:$true] %s304
          %307 = dma.hbm_to_vmem [thread:$0]  %s302, 64, %s305, %s293
        $region40: #{tpu_custom_call.1} parent=27 // pred_fallthru
          _
      $region28: #{tpu_custom_call.1} parent=5 // pred_fallthru
        _
      %p308 = scmp.le.s32.totalorder 1, %s27
      %p309 = scmp.lt.s32.totalorder %s27, 4
      %p310 = pnand %p308, %p309
      %p311 = pneg %p310
      // Predicated region
      $region41: #{tpu_custom_call.1} parent=5 // pred_check
        _
      $region42: #{tpu_custom_call.1} parent=5 // pred_check_branch
        %313 = sbr.rel (%p310) target = $region44
      $region43: #{tpu_custom_call.1} parent=5 // pred_region
        %s314 = ssub.s32 %s27, 1
        %s315 = sand.u32 %s40, 1
        %s316 = scalar_lea.sflag [#allocation5], %s315
        %s317 = sand.u32 %s40, 1
        %s318 = smul.addr %s317, 8
        %s319 = scalar_lea.vmem [#allocation4], %s318
        // Predicated region
        $region45: #{tpu_custom_call.1} parent=43 // pred_check
          %p320 = pneg %p53
        $region46: #{tpu_custom_call.1} parent=43 // pred_check_branch
          %322 = sbr.rel (%p320) target = $region48
        $region47: #{tpu_custom_call.1} parent=43 // pred_region
          %323 = dma.done %s316, 128
        $region48: #{tpu_custom_call.1} parent=43 // pred_fallthru
          _
        // Predicated region
        $region49: #{tpu_custom_call.1} parent=43 // pred_check
          %p324 = pneg %p74
        $region50: #{tpu_custom_call.1} parent=43 // pred_check_branch
          %326 = sbr.rel (%p324) target = $region52
        $region51: #{tpu_custom_call.1} parent=43 // pred_region
          %327 = dma.done [#allocation8], 1024
        $region52: #{tpu_custom_call.1} parent=43 // pred_fallthru
          _
        // Predicated region
        $region53: #{tpu_custom_call.1} parent=43 // pred_check
          %p328 = pneg %p116
        $region54: #{tpu_custom_call.1} parent=43 // pred_check_branch
          %330 = sbr.rel (%p328) target = $region56
        $region55: #{tpu_custom_call.1} parent=43 // pred_region
          %331 = dma.done [#allocation8], 3072
        $region56: #{tpu_custom_call.1} parent=43 // pred_fallthru
          _
        %s332 = sand.u32 %s32, 1
        %s333 = scalar_lea.sflag [#allocation11], %s332
        %s334 = sand.u32 %s131, 1
        %s335 = smul.addr %s334, 256
        %s336 = scalar_lea.vmem [#allocation10], %s335
        // Predicated region
        $region57: #{tpu_custom_call.1} parent=43 // pred_check
          %p337 = pneg %p144
        $region58: #{tpu_custom_call.1} parent=43 // pred_check_branch
          %339 = sbr.rel (%p337) target = $region60
        $region59: #{tpu_custom_call.1} parent=43 // pred_region
          %340 = dma.done %s333, 4096
        $region60: #{tpu_custom_call.1} parent=43 // pred_fallthru
          _
        %s341 = sand.u32 %s32, 1
        %s342 = scalar_lea.sflag [#allocation11], %s341
        %s343 = sand.u32 %s159, 1
        %s344 = smul.addr %s343, 4
        %s345 = scalar_lea.vmem [#allocation12], %s344
        // Predicated region
        $region61: #{tpu_custom_call.1} parent=43 // pred_check
          %p346 = pneg %p172
        $region62: #{tpu_custom_call.1} parent=43 // pred_check_branch
          %348 = sbr.rel (%p346) target = $region64
        $region63: #{tpu_custom_call.1} parent=43 // pred_region
          %349 = dma.done %s342, 64
        $region64: #{tpu_custom_call.1} parent=43 // pred_fallthru
          _
        %s350 = sand.u32 %s40, 1
        %s351 = scalar_lea.sflag [#allocation5], %s350
        %s352 = sand.u32 %s40, 1
        %s353 = smul.addr %s352, 8
        %s354 = scalar_lea.vmem [#allocation4], %s353
        %p355 = pneg %p53
        %p356 = pneg %p50
        %p357 = pneg %p74
        %p358 = pneg %p71
        %p359 = pneg %p95
        %p360 = pneg %p92
        %p361 = pneg %p116
        %p362 = pneg %p113
        %s363 = sand.u32 %s32, 1
        %s364 = scalar_lea.sflag [#allocation11], %s363
        %s365 = sand.u32 %s131, 1
        %s366 = smul.addr %s365, 256
        %s367 = scalar_lea.vmem [#allocation10], %s366
        %p368 = pneg %p144
        %p369 = pneg %p141
        %s370 = sand.u32 %s32, 1
        %s371 = scalar_lea.sflag [#allocation11], %s370
        %s372 = sand.u32 %s159, 1
        %s373 = smul.addr %s372, 4
        %s374 = scalar_lea.vmem [#allocation12], %s373
        %p375 = pneg %p172
        %p376 = pneg %p169
        %p377 = pneg %p198
        %p378 = pneg %p195
        %s379 = sand.u32 %s185, 1
        %s380 = scalar_lea.sflag [#allocation6], %s379
        %s381 = sand.u32 %s185, 1
        %s382 = smul.addr %s381, 16
        %s383 = scalar_lea.vmem [#allocation13], %s382
        %s384 = smul.u32 2, %s32
        %s385 = sld [smem:[#allocation3 + %s32]]
        %s386 = sld [smem:[#allocation3 + %s32]]
        %s387 = smul.u32 2, %s32
        %v389 = vld [vmem:[%s319] sm:$0xf]
        %v390 = vld [vmem:[%s319 + $0x4] sm:$0xf]
        %v391 = vld [vmem:[#allocation7] sm:$0xf]
        %v392 = vld [vmem:[#allocation7 + $0x4] sm:$0xf]
        %v393 = vld [vmem:[#allocation7 + $0x8] sm:$0xf]
        %v394 = vld [vmem:[#allocation7 + $0xc] sm:$0xf]
        %v395 = vld [vmem:[#allocation7 + $0x10] sm:$0xf]
        %v396 = vld [vmem:[#allocation7 + $0x14] sm:$0xf]
        %v397 = vld [vmem:[#allocation7 + $0x18] sm:$0xf]
        %v398 = vld [vmem:[#allocation7 + $0x1c] sm:$0xf]
        %v399 = vld [vmem:[#allocation7 + $0x20] sm:$0xf]
        %v400 = vld [vmem:[#allocation7 + $0x24] sm:$0xf]
        %v401 = vld [vmem:[#allocation7 + $0x28] sm:$0xf]
        %v402 = vld [vmem:[#allocation7 + $0x2c] sm:$0xf]
        %v403 = vld [vmem:[#allocation7 + $0x30] sm:$0xf]
        %v404 = vld [vmem:[#allocation7 + $0x34] sm:$0xf]
        %v405 = vld [vmem:[#allocation7 + $0x38] sm:$0xf]
        %v406 = vld [vmem:[#allocation7 + $0x3c] sm:$0xf]
        %v407 = vld [vmem:[%s3] sm:$0x1]
        %v408 = vlaneseq
        %v409 = vshrl.u32 %v408, 7
        %v410 = vsub.s32 0, %v409
        %v411 = vrot.slane %v407, %v410
        %v414 = vunpack.c.l.b16 %v389
        %v415 = vunpack.c.l.b16 %v390
        %v416 = vpack.c.b16 %v415, %v414
        %v434 = vunpack.c.l.b16 %v391
        %v435 = vunpack.c.l.b16 %v392
        %v436 = vunpack.c.l.b16 %v393
        %v437 = vunpack.c.l.b16 %v394
        %v438 = vunpack.c.l.b16 %v395
        %v439 = vunpack.c.l.b16 %v396
        %v440 = vunpack.c.l.b16 %v397
        %v441 = vunpack.c.l.b16 %v398
        %v442 = vunpack.c.l.b16 %v399
        %v443 = vunpack.c.l.b16 %v400
        %v444 = vunpack.c.l.b16 %v401
        %v445 = vunpack.c.l.b16 %v402
        %v446 = vunpack.c.l.b16 %v403
        %v447 = vunpack.c.l.b16 %v404
        %v448 = vunpack.c.l.b16 %v405
        %v449 = vunpack.c.l.b16 %v406
        %v450 = vpack.c.b16 %v435, %v434
        %v451 = vpack.c.b16 %v437, %v436
        %v452 = vpack.c.b16 %v439, %v438
        %v453 = vpack.c.b16 %v441, %v440
        %v454 = vpack.c.b16 %v443, %v442
        %v455 = vpack.c.b16 %v445, %v444
        %v456 = vpack.c.b16 %v447, %v446
        %v457 = vpack.c.b16 %v449, %v448
        %466 = vmatprep.subr.bf16.mxu0 0
        %467 = vmatpush1.bf16.msra.mxu0 %v457
        %468 = vmatprep.subr.bf16.mxu0 0
        %469 = vmatpush1.bf16.msra.mxu0 %v456
        %470 = vmatprep.subr.bf16.mxu0 0
        %471 = vmatpush1.bf16.msra.mxu0 %v455
        %472 = vmatprep.subr.bf16.mxu0 0
        %473 = vmatpush1.bf16.msra.mxu0 %v454
        %474 = vmatprep.subr.bf16.mxu0 0
        %475 = vmatpush1.bf16.msra.mxu0 %v453
        %476 = vmatprep.subr.bf16.mxu0 0
        %477 = vmatpush1.bf16.msra.mxu0 %v452
        %478 = vmatprep.subr.bf16.mxu0 0
        %479 = vmatpush1.bf16.msra.mxu0 %v451
        %480 = vmatprep.subr.bf16.mxu0 0
        %481 = vmatpush1.bf16.msra.mxu0 %v450
        %482 = vmatprep.subr.bf16.mxu0 0
        %483 = vmatpush2.bf16.msra.mxu0 0
        %484 = vmatprep.subr.bf16.mxu0 0
        %485 = vmatpush2.bf16.msra.mxu0 0
        %486 = vmatprep.subr.bf16.mxu0 0
        %487 = vmatpush2.bf16.msra.mxu0 0
        %488 = vmatprep.subr.bf16.mxu0 0
        %489 = vmatpush2.bf16.msra.mxu0 0
        %490 = vmatprep.subr.bf16.mxu0 0
        %491 = vmatpush2.bf16.msra.mxu0 0
        %492 = vmatprep.subr.bf16.mxu0 0
        %493 = vmatpush2.bf16.msra.mxu0 0
        %494 = vmatprep.subr.bf16.mxu0 0
        %495 = vmatpush2.bf16.msra.mxu0 0
        %496 = vmatprep.subr.bf16.mxu0 0
        %497 = vmatpush2.bf16.msra.mxu0 0
        %498 = vmatprep.mubr.bf16.mxu0 0
        %499 = vmatmul.mubr.bf16.gmra.mxu0 %v416
        %v500 = vpop.f32.mrf.mxu0
        %v501 = vadd.f32 %v411, %v500
        %v502 = vpop.f32.mrf.mxu0
        %v503 = vpop.f32.mrf.mxu0
        %v504 = vadd.f32 %v411, %v503
        %v505 = vpop.f32.mrf.mxu0
        %506 = vdwg.mxu0
        %v507 = vmax.f32 %v501, 0.0
        %v508 = vmax.f32 %v504, 0.0
        %v509 = vpack.c.bf16 %v508, %v507
        %v510 = vld [vmem:[#allocation9] sm:$0xf]
        %v511 = vld [vmem:[#allocation9 + $0x4] sm:$0xf]
        %v512 = vld [vmem:[#allocation9 + $0x8] sm:$0xf]
        %v513 = vld [vmem:[#allocation9 + $0xc] sm:$0xf]
        %v514 = vld [vmem:[#allocation9 + $0x10] sm:$0xf]
        %v515 = vld [vmem:[#allocation9 + $0x14] sm:$0xf]
        %v516 = vld [vmem:[#allocation9 + $0x18] sm:$0xf]
        %v517 = vld [vmem:[#allocation9 + $0x1c] sm:$0xf]
        %v518 = vld [vmem:[#allocation9 + $0x20] sm:$0xf]
        %v519 = vld [vmem:[#allocation9 + $0x24] sm:$0xf]
        %v520 = vld [vmem:[#allocation9 + $0x28] sm:$0xf]
        %v521 = vld [vmem:[#allocation9 + $0x2c] sm:$0xf]
        %v522 = vld [vmem:[#allocation9 + $0x30] sm:$0xf]
        %v523 = vld [vmem:[#allocation9 + $0x34] sm:$0xf]
        %v524 = vld [vmem:[#allocation9 + $0x38] sm:$0xf]
        %v525 = vld [vmem:[#allocation9 + $0x3c] sm:$0xf]
        %v526 = vld [vmem:[%s3 + $0x1] sm:$0x1]
        %v527 = vlaneseq
        %v528 = vshrl.u32 %v527, 7
        %v529 = vsub.s32 0, %v528
        %v530 = vrot.slane %v526, %v529
        %v547 = vunpack.c.l.b16 %v510
        %v548 = vunpack.c.l.b16 %v511
        %v549 = vunpack.c.l.b16 %v512
        %v550 = vunpack.c.l.b16 %v513
        %v551 = vunpack.c.l.b16 %v514
        %v552 = vunpack.c.l.b16 %v515
        %v553 = vunpack.c.l.b16 %v516
        %v554 = vunpack.c.l.b16 %v517
        %v555 = vunpack.c.l.b16 %v518
        %v556 = vunpack.c.l.b16 %v519
        %v557 = vunpack.c.l.b16 %v520
        %v558 = vunpack.c.l.b16 %v521
        %v559 = vunpack.c.l.b16 %v522
        %v560 = vunpack.c.l.b16 %v523
        %v561 = vunpack.c.l.b16 %v524
        %v562 = vunpack.c.l.b16 %v525
        %v563 = vpack.c.b16 %v548, %v547
        %v564 = vpack.c.b16 %v550, %v549
        %v565 = vpack.c.b16 %v552, %v551
        %v566 = vpack.c.b16 %v554, %v553
        %v567 = vpack.c.b16 %v556, %v555
        %v568 = vpack.c.b16 %v558, %v557
        %v569 = vpack.c.b16 %v560, %v559
        %v570 = vpack.c.b16 %v562, %v561
        %579 = vmatprep.subr.bf16.mxu0 0
        %580 = vmatpush1.bf16.msra.mxu0 %v570
        %581 = vmatprep.subr.bf16.mxu0 0
        %582 = vmatpush1.bf16.msra.mxu0 %v569
        %583 = vmatprep.subr.bf16.mxu0 0
        %584 = vmatpush1.bf16.msra.mxu0 %v568
        %585 = vmatprep.subr.bf16.mxu0 0
        %586 = vmatpush1.bf16.msra.mxu0 %v567
        %587 = vmatprep.subr.bf16.mxu0 0
        %588 = vmatpush1.bf16.msra.mxu0 %v566
        %589 = vmatprep.subr.bf16.mxu0 0
        %590 = vmatpush1.bf16.msra.mxu0 %v565
        %591 = vmatprep.subr.bf16.mxu0 0
        %592 = vmatpush1.bf16.msra.mxu0 %v564
        %593 = vmatprep.subr.bf16.mxu0 0
        %594 = vmatpush1.bf16.msra.mxu0 %v563
        %595 = vmatprep.subr.bf16.mxu0 0
        %596 = vmatpush2.bf16.msra.mxu0 0
        %597 = vmatprep.subr.bf16.mxu0 0
        %598 = vmatpush2.bf16.msra.mxu0 0
        %599 = vmatprep.subr.bf16.mxu0 0
        %600 = vmatpush2.bf16.msra.mxu0 0
        %601 = vmatprep.subr.bf16.mxu0 0
        %602 = vmatpush2.bf16.msra.mxu0 0
        %603 = vmatprep.subr.bf16.mxu0 0
        %604 = vmatpush2.bf16.msra.mxu0 0
        %605 = vmatprep.subr.bf16.mxu0 0
        %606 = vmatpush2.bf16.msra.mxu0 0
        %607 = vmatprep.subr.bf16.mxu0 0
        %608 = vmatpush2.bf16.msra.mxu0 0
        %609 = vmatprep.subr.bf16.mxu0 0
        %610 = vmatpush2.bf16.msra.mxu0 0
        %611 = vmatprep.mubr.bf16.mxu0 0
        %612 = vmatmul.mubr.bf16.gmra.mxu0 %v509
        %v613 = vpop.f32.mrf.mxu0
        %v614 = vadd.f32 %v530, %v613
        %v615 = vpop.f32.mrf.mxu0
        %v616 = vpop.f32.mrf.mxu0
        %v617 = vadd.f32 %v530, %v616
        %v618 = vpop.f32.mrf.mxu0
        %619 = vdwg.mxu0
        %v620 = vmax.f32 %v614, 0.0
        %v621 = vmax.f32 %v617, 0.0
        %v622 = vpack.c.bf16 %v621, %v620
        %s623 = scalar_lea.vmem [#allocation9], 64
        %v624 = vld [vmem:[%s623] sm:$0xf]
        %v625 = vld [vmem:[%s623 + $0x4] sm:$0xf]
        %v626 = vld [vmem:[%s623 + $0x8] sm:$0xf]
        %v627 = vld [vmem:[%s623 + $0xc] sm:$0xf]
        %v628 = vld [vmem:[%s623 + $0x10] sm:$0xf]
        %v629 = vld [vmem:[%s623 + $0x14] sm:$0xf]
        %v630 = vld [vmem:[%s623 + $0x18] sm:$0xf]
        %v631 = vld [vmem:[%s623 + $0x1c] sm:$0xf]
        %v632 = vld [vmem:[%s623 + $0x20] sm:$0xf]
        %v633 = vld [vmem:[%s623 + $0x24] sm:$0xf]
        %v634 = vld [vmem:[%s623 + $0x28] sm:$0xf]
        %v635 = vld [vmem:[%s623 + $0x2c] sm:$0xf]
        %v636 = vld [vmem:[%s623 + $0x30] sm:$0xf]
        %v637 = vld [vmem:[%s623 + $0x34] sm:$0xf]
        %v638 = vld [vmem:[%s623 + $0x38] sm:$0xf]
        %v639 = vld [vmem:[%s623 + $0x3c] sm:$0xf]
        %v640 = vld [vmem:[%s3 + $0x2] sm:$0x1]
        %v641 = vlaneseq
        %v642 = vshrl.u32 %v641, 7
        %v643 = vsub.s32 0, %v642
        %v644 = vrot.slane %v640, %v643
        %v661 = vunpack.c.l.b16 %v624
        %v662 = vunpack.c.l.b16 %v625
        %v663 = vunpack.c.l.b16 %v626
        %v664 = vunpack.c.l.b16 %v627
        %v665 = vunpack.c.l.b16 %v628
        %v666 = vunpack.c.l.b16 %v629
        %v667 = vunpack.c.l.b16 %v630
        %v668 = vunpack.c.l.b16 %v631
        %v669 = vunpack.c.l.b16 %v632
        %v670 = vunpack.c.l.b16 %v633
        %v671 = vunpack.c.l.b16 %v634
        %v672 = vunpack.c.l.b16 %v635
        %v673 = vunpack.c.l.b16 %v636
        %v674 = vunpack.c.l.b16 %v637
        %v675 = vunpack.c.l.b16 %v638
        %v676 = vunpack.c.l.b16 %v639
        %v677 = vpack.c.b16 %v662, %v661
        %v678 = vpack.c.b16 %v664, %v663
        %v679 = vpack.c.b16 %v666, %v665
        %v680 = vpack.c.b16 %v668, %v667
        %v681 = vpack.c.b16 %v670, %v669
        %v682 = vpack.c.b16 %v672, %v671
        %v683 = vpack.c.b16 %v674, %v673
        %v684 = vpack.c.b16 %v676, %v675
        %693 = vmatprep.subr.bf16.mxu0 0
        %694 = vmatpush1.bf16.msra.mxu0 %v684
        %695 = vmatprep.subr.bf16.mxu0 0
        %696 = vmatpush1.bf16.msra.mxu0 %v683
        %697 = vmatprep.subr.bf16.mxu0 0
        %698 = vmatpush1.bf16.msra.mxu0 %v682
        %699 = vmatprep.subr.bf16.mxu0 0
        %700 = vmatpush1.bf16.msra.mxu0 %v681
        %701 = vmatprep.subr.bf16.mxu0 0
        %702 = vmatpush1.bf16.msra.mxu0 %v680
        %703 = vmatprep.subr.bf16.mxu0 0
        %704 = vmatpush1.bf16.msra.mxu0 %v679
        %705 = vmatprep.subr.bf16.mxu0 0
        %706 = vmatpush1.bf16.msra.mxu0 %v678
        %707 = vmatprep.subr.bf16.mxu0 0
        %708 = vmatpush1.bf16.msra.mxu0 %v677
        %709 = vmatprep.subr.bf16.mxu0 0
        %710 = vmatpush2.bf16.msra.mxu0 0
        %711 = vmatprep.subr.bf16.mxu0 0
        %712 = vmatpush2.bf16.msra.mxu0 0
        %713 = vmatprep.subr.bf16.mxu0 0
        %714 = vmatpush2.bf16.msra.mxu0 0
        %715 = vmatprep.subr.bf16.mxu0 0
        %716 = vmatpush2.bf16.msra.mxu0 0
        %717 = vmatprep.subr.bf16.mxu0 0
        %718 = vmatpush2.bf16.msra.mxu0 0
        %719 = vmatprep.subr.bf16.mxu0 0
        %720 = vmatpush2.bf16.msra.mxu0 0
        %721 = vmatprep.subr.bf16.mxu0 0
        %722 = vmatpush2.bf16.msra.mxu0 0
        %723 = vmatprep.subr.bf16.mxu0 0
        %724 = vmatpush2.bf16.msra.mxu0 0
        %725 = vmatprep.mubr.bf16.mxu0 0
        %726 = vmatmul.mubr.bf16.gmra.mxu0 %v622
        %v727 = vpop.f32.mrf.mxu0
        %v728 = vadd.f32 %v644, %v727
        %v729 = vpop.f32.mrf.mxu0
        %v730 = vpop.f32.mrf.mxu0
        %v731 = vadd.f32 %v644, %v730
        %v732 = vpop.f32.mrf.mxu0
        %733 = vdwg.mxu0
        %v734 = vmax.f32 %v728, 0.0
        %v735 = vmax.f32 %v731, 0.0
        %v736 = vpack.c.bf16 %v735, %v734
        %s737 = scalar_lea.vmem [#allocation9], 128
        %v738 = vld [vmem:[%s737] sm:$0xf]
        %v739 = vld [vmem:[%s737 + $0x4] sm:$0xf]
        %v740 = vld [vmem:[%s737 + $0x8] sm:$0xf]
        %v741 = vld [vmem:[%s737 + $0xc] sm:$0xf]
        %v742 = vld [vmem:[%s737 + $0x10] sm:$0xf]
        %v743 = vld [vmem:[%s737 + $0x14] sm:$0xf]
        %v744 = vld [vmem:[%s737 + $0x18] sm:$0xf]
        %v745 = vld [vmem:[%s737 + $0x1c] sm:$0xf]
        %v746 = vld [vmem:[%s737 + $0x20] sm:$0xf]
        %v747 = vld [vmem:[%s737 + $0x24] sm:$0xf]
        %v748 = vld [vmem:[%s737 + $0x28] sm:$0xf]
        %v749 = vld [vmem:[%s737 + $0x2c] sm:$0xf]
        %v750 = vld [vmem:[%s737 + $0x30] sm:$0xf]
        %v751 = vld [vmem:[%s737 + $0x34] sm:$0xf]
        %v752 = vld [vmem:[%s737 + $0x38] sm:$0xf]
        %v753 = vld [vmem:[%s737 + $0x3c] sm:$0xf]
        %v754 = vld [vmem:[%s3 + $0x3] sm:$0x1]
        %v755 = vlaneseq
        %v756 = vshrl.u32 %v755, 7
        %v757 = vsub.s32 0, %v756
        %v758 = vrot.slane %v754, %v757
        %v775 = vunpack.c.l.b16 %v738
        %v776 = vunpack.c.l.b16 %v739
        %v777 = vunpack.c.l.b16 %v740
        %v778 = vunpack.c.l.b16 %v741
        %v779 = vunpack.c.l.b16 %v742
        %v780 = vunpack.c.l.b16 %v743
        %v781 = vunpack.c.l.b16 %v744
        %v782 = vunpack.c.l.b16 %v745
        %v783 = vunpack.c.l.b16 %v746
        %v784 = vunpack.c.l.b16 %v747
        %v785 = vunpack.c.l.b16 %v748
        %v786 = vunpack.c.l.b16 %v749
        %v787 = vunpack.c.l.b16 %v750
        %v788 = vunpack.c.l.b16 %v751
        %v789 = vunpack.c.l.b16 %v752
        %v790 = vunpack.c.l.b16 %v753
        %v791 = vpack.c.b16 %v776, %v775
        %v792 = vpack.c.b16 %v778, %v777
        %v793 = vpack.c.b16 %v780, %v779
        %v794 = vpack.c.b16 %v782, %v781
        %v795 = vpack.c.b16 %v784, %v783
        %v796 = vpack.c.b16 %v786, %v785
        %v797 = vpack.c.b16 %v788, %v787
        %v798 = vpack.c.b16 %v790, %v789
        %807 = vmatprep.subr.bf16.mxu0 0
        %808 = vmatpush1.bf16.msra.mxu0 %v798
        %809 = vmatprep.subr.bf16.mxu0 0
        %810 = vmatpush1.bf16.msra.mxu0 %v797
        %811 = vmatprep.subr.bf16.mxu0 0
        %812 = vmatpush1.bf16.msra.mxu0 %v796
        %813 = vmatprep.subr.bf16.mxu0 0
        %814 = vmatpush1.bf16.msra.mxu0 %v795
        %815 = vmatprep.subr.bf16.mxu0 0
        %816 = vmatpush1.bf16.msra.mxu0 %v794
        %817 = vmatprep.subr.bf16.mxu0 0
        %818 = vmatpush1.bf16.msra.mxu0 %v793
        %819 = vmatprep.subr.bf16.mxu0 0
        %820 = vmatpush1.bf16.msra.mxu0 %v792
        %821 = vmatprep.subr.bf16.mxu0 0
        %822 = vmatpush1.bf16.msra.mxu0 %v791
        %823 = vmatprep.subr.bf16.mxu0 0
        %824 = vmatpush2.bf16.msra.mxu0 0
        %825 = vmatprep.subr.bf16.mxu0 0
        %826 = vmatpush2.bf16.msra.mxu0 0
        %827 = vmatprep.subr.bf16.mxu0 0
        %828 = vmatpush2.bf16.msra.mxu0 0
        %829 = vmatprep.subr.bf16.mxu0 0
        %830 = vmatpush2.bf16.msra.mxu0 0
        %831 = vmatprep.subr.bf16.mxu0 0
        %832 = vmatpush2.bf16.msra.mxu0 0
        %833 = vmatprep.subr.bf16.mxu0 0
        %834 = vmatpush2.bf16.msra.mxu0 0
        %835 = vmatprep.subr.bf16.mxu0 0
        %836 = vmatpush2.bf16.msra.mxu0 0
        %837 = vmatprep.subr.bf16.mxu0 0
        %838 = vmatpush2.bf16.msra.mxu0 0
        %839 = vmatprep.mubr.bf16.mxu0 0
        %840 = vmatmul.mubr.bf16.gmra.mxu0 %v736
        %v841 = vpop.f32.mrf.mxu0
        %v842 = vadd.f32 %v758, %v841
        %v843 = vpop.f32.mrf.mxu0
        %v844 = vpop.f32.mrf.mxu0
        %v845 = vadd.f32 %v758, %v844
        %v846 = vpop.f32.mrf.mxu0
        %847 = vdwg.mxu0
        %v848 = vmax.f32 %v842, 0.0
        %v849 = vmax.f32 %v845, 0.0
        %v850 = vpack.c.bf16 %v849, %v848
        %v851 = vld [vmem:[%s336] sm:$0xf]
        %v852 = vld [vmem:[%s336 + $0x4] sm:$0xf]
        %v853 = vld [vmem:[%s336 + $0x8] sm:$0xf]
        %v854 = vld [vmem:[%s336 + $0xc] sm:$0xf]
        %v855 = vld [vmem:[%s336 + $0x10] sm:$0xf]
        %v856 = vld [vmem:[%s336 + $0x14] sm:$0xf]
        %v857 = vld [vmem:[%s336 + $0x18] sm:$0xf]
        %v858 = vld [vmem:[%s336 + $0x1c] sm:$0xf]
        %v859 = vld [vmem:[%s336 + $0x20] sm:$0xf]
        %v860 = vld [vmem:[%s336 + $0x24] sm:$0xf]
        %v861 = vld [vmem:[%s336 + $0x28] sm:$0xf]
        %v862 = vld [vmem:[%s336 + $0x2c] sm:$0xf]
        %v863 = vld [vmem:[%s336 + $0x30] sm:$0xf]
        %v864 = vld [vmem:[%s336 + $0x34] sm:$0xf]
        %v865 = vld [vmem:[%s336 + $0x38] sm:$0xf]
        %v866 = vld [vmem:[%s336 + $0x3c] sm:$0xf]
        %v867 = vld [vmem:[%s345] sm:$0x1]
        %v868 = vlaneseq
        %v869 = vshrl.u32 %v868, 7
        %v870 = vsub.s32 0, %v869
        %v871 = vrot.slane %v867, %v870
        %v888 = vunpack.c.l.b16 %v851
        %v889 = vunpack.c.l.b16 %v852
        %v890 = vunpack.c.l.b16 %v853
        %v891 = vunpack.c.l.b16 %v854
        %v892 = vunpack.c.l.b16 %v855
        %v893 = vunpack.c.l.b16 %v856
        %v894 = vunpack.c.l.b16 %v857
        %v895 = vunpack.c.l.b16 %v858
        %v896 = vunpack.c.l.b16 %v859
        %v897 = vunpack.c.l.b16 %v860
        %v898 = vunpack.c.l.b16 %v861
        %v899 = vunpack.c.l.b16 %v862
        %v900 = vunpack.c.l.b16 %v863
        %v901 = vunpack.c.l.b16 %v864
        %v902 = vunpack.c.l.b16 %v865
        %v903 = vunpack.c.l.b16 %v866
        %v904 = vpack.c.b16 %v889, %v888
        %v905 = vpack.c.b16 %v891, %v890
        %v906 = vpack.c.b16 %v893, %v892
        %v907 = vpack.c.b16 %v895, %v894
        %v908 = vpack.c.b16 %v897, %v896
        %v909 = vpack.c.b16 %v899, %v898
        %v910 = vpack.c.b16 %v901, %v900
        %v911 = vpack.c.b16 %v903, %v902
        %920 = vmatprep.subr.bf16.mxu0 0
        %921 = vmatpush1.bf16.msra.mxu0 %v911
        %922 = vmatprep.subr.bf16.mxu0 0
        %923 = vmatpush1.bf16.msra.mxu0 %v910
        %924 = vmatprep.subr.bf16.mxu0 0
        %925 = vmatpush1.bf16.msra.mxu0 %v909
        %926 = vmatprep.subr.bf16.mxu0 0
        %927 = vmatpush1.bf16.msra.mxu0 %v908
        %928 = vmatprep.subr.bf16.mxu0 0
        %929 = vmatpush1.bf16.msra.mxu0 %v907
        %930 = vmatprep.subr.bf16.mxu0 0
        %931 = vmatpush1.bf16.msra.mxu0 %v906
        %932 = vmatprep.subr.bf16.mxu0 0
        %933 = vmatpush1.bf16.msra.mxu0 %v905
        %934 = vmatprep.subr.bf16.mxu0 0
        %935 = vmatpush1.bf16.msra.mxu0 %v904
        %936 = vmatprep.subr.bf16.mxu0 0
        %937 = vmatpush2.bf16.msra.mxu0 0
        %938 = vmatprep.subr.bf16.mxu0 0
        %939 = vmatpush2.bf16.msra.mxu0 0
        %940 = vmatprep.subr.bf16.mxu0 0
        %941 = vmatpush2.bf16.msra.mxu0 0
        %942 = vmatprep.subr.bf16.mxu0 0
        %943 = vmatpush2.bf16.msra.mxu0 0
        %944 = vmatprep.subr.bf16.mxu0 0
        %945 = vmatpush2.bf16.msra.mxu0 0
        %946 = vmatprep.subr.bf16.mxu0 0
        %947 = vmatpush2.bf16.msra.mxu0 0
        %948 = vmatprep.subr.bf16.mxu0 0
        %949 = vmatpush2.bf16.msra.mxu0 0
        %950 = vmatprep.subr.bf16.mxu0 0
        %951 = vmatpush2.bf16.msra.mxu0 0
        %952 = vmatprep.mubr.bf16.mxu0 0
        %953 = vmatmul.mubr.bf16.gmra.mxu0 %v850
        %v954 = vpop.f32.mrf.mxu0
        %v955 = vadd.f32 %v871, %v954
        %v956 = vpop.f32.mrf.mxu0
        %v957 = vpop.f32.mrf.mxu0
        %v958 = vadd.f32 %v871, %v957
        %v959 = vpop.f32.mrf.mxu0
        %960 = vdwg.mxu0
        %v961 = vmax.f32 %v955, 0.0
        %v962 = vmax.f32 %v958, 0.0
        %v963 = vpack.c.bf16 %v962, %v961
        %s964 = scalar_lea.vmem %s336, 64 [#allocation10]
        %v965 = vld [vmem:[%s964] sm:$0xf]
        %v966 = vld [vmem:[%s964 + $0x4] sm:$0xf]
        %v967 = vld [vmem:[%s964 + $0x8] sm:$0xf]
        %v968 = vld [vmem:[%s964 + $0xc] sm:$0xf]
        %v969 = vld [vmem:[%s964 + $0x10] sm:$0xf]
        %v970 = vld [vmem:[%s964 + $0x14] sm:$0xf]
        %v971 = vld [vmem:[%s964 + $0x18] sm:$0xf]
        %v972 = vld [vmem:[%s964 + $0x1c] sm:$0xf]
        %v973 = vld [vmem:[%s964 + $0x20] sm:$0xf]
        %v974 = vld [vmem:[%s964 + $0x24] sm:$0xf]
        %v975 = vld [vmem:[%s964 + $0x28] sm:$0xf]
        %v976 = vld [vmem:[%s964 + $0x2c] sm:$0xf]
        %v977 = vld [vmem:[%s964 + $0x30] sm:$0xf]
        %v978 = vld [vmem:[%s964 + $0x34] sm:$0xf]
        %v979 = vld [vmem:[%s964 + $0x38] sm:$0xf]
        %v980 = vld [vmem:[%s964 + $0x3c] sm:$0xf]
        %v981 = vld [vmem:[%s345 + $0x1] sm:$0x1]
        %v982 = vlaneseq
        %v983 = vshrl.u32 %v982, 7
        %v984 = vsub.s32 0, %v983
        %v985 = vrot.slane %v981, %v984
        %v1002 = vunpack.c.l.b16 %v965
        %v1003 = vunpack.c.l.b16 %v966
        %v1004 = vunpack.c.l.b16 %v967
        %v1005 = vunpack.c.l.b16 %v968
        %v1006 = vunpack.c.l.b16 %v969
        %v1007 = vunpack.c.l.b16 %v970
        %v1008 = vunpack.c.l.b16 %v971
        %v1009 = vunpack.c.l.b16 %v972
        %v1010 = vunpack.c.l.b16 %v973
        %v1011 = vunpack.c.l.b16 %v974
        %v1012 = vunpack.c.l.b16 %v975
        %v1013 = vunpack.c.l.b16 %v976
        %v1014 = vunpack.c.l.b16 %v977
        %v1015 = vunpack.c.l.b16 %v978
        %v1016 = vunpack.c.l.b16 %v979
        %v1017 = vunpack.c.l.b16 %v980
        %v1018 = vpack.c.b16 %v1003, %v1002
        %v1019 = vpack.c.b16 %v1005, %v1004
        %v1020 = vpack.c.b16 %v1007, %v1006
        %v1021 = vpack.c.b16 %v1009, %v1008
        %v1022 = vpack.c.b16 %v1011, %v1010
        %v1023 = vpack.c.b16 %v1013, %v1012
        %v1024 = vpack.c.b16 %v1015, %v1014
        %v1025 = vpack.c.b16 %v1017, %v1016
        %1034 = vmatprep.subr.bf16.mxu0 0
        %1035 = vmatpush1.bf16.msra.mxu0 %v1025
        %1036 = vmatprep.subr.bf16.mxu0 0
        %1037 = vmatpush1.bf16.msra.mxu0 %v1024
        %1038 = vmatprep.subr.bf16.mxu0 0
        %1039 = vmatpush1.bf16.msra.mxu0 %v1023
        %1040 = vmatprep.subr.bf16.mxu0 0
        %1041 = vmatpush1.bf16.msra.mxu0 %v1022
        %1042 = vmatprep.subr.bf16.mxu0 0
        %1043 = vmatpush1.bf16.msra.mxu0 %v1021
        %1044 = vmatprep.subr.bf16.mxu0 0
        %1045 = vmatpush1.bf16.msra.mxu0 %v1020
        %1046 = vmatprep.subr.bf16.mxu0 0
        %1047 = vmatpush1.bf16.msra.mxu0 %v1019
        %1048 = vmatprep.subr.bf16.mxu0 0
        %1049 = vmatpush1.bf16.msra.mxu0 %v1018
        %1050 = vmatprep.subr.bf16.mxu0 0
        %1051 = vmatpush2.bf16.msra.mxu0 0
        %1052 = vmatprep.subr.bf16.mxu0 0
        %1053 = vmatpush2.bf16.msra.mxu0 0
        %1054 = vmatprep.subr.bf16.mxu0 0
        %1055 = vmatpush2.bf16.msra.mxu0 0
        %1056 = vmatprep.subr.bf16.mxu0 0
        %1057 = vmatpush2.bf16.msra.mxu0 0
        %1058 = vmatprep.subr.bf16.mxu0 0
        %1059 = vmatpush2.bf16.msra.mxu0 0
        %1060 = vmatprep.subr.bf16.mxu0 0
        %1061 = vmatpush2.bf16.msra.mxu0 0
        %1062 = vmatprep.subr.bf16.mxu0 0
        %1063 = vmatpush2.bf16.msra.mxu0 0
        %1064 = vmatprep.subr.bf16.mxu0 0
        %1065 = vmatpush2.bf16.msra.mxu0 0
        %1066 = vmatprep.mubr.bf16.mxu0 0
        %1067 = vmatmul.mubr.bf16.gmra.mxu0 %v963
        %v1068 = vpop.f32.mrf.mxu0
        %v1069 = vadd.f32 %v985, %v1068
        %v1070 = vpop.f32.mrf.mxu0
        %v1071 = vpop.f32.mrf.mxu0
        %v1072 = vadd.f32 %v985, %v1071
        %v1073 = vpop.f32.mrf.mxu0
        %1074 = vdwg.mxu0
        %v1075 = vmax.f32 %v1069, 0.0
        %v1076 = vmax.f32 %v1072, 0.0
        %v1077 = vpack.c.bf16 %v1076, %v1075
        %s1078 = scalar_lea.vmem %s336, 128 [#allocation10]
        %v1079 = vld [vmem:[%s1078] sm:$0xf]
        %v1080 = vld [vmem:[%s1078 + $0x4] sm:$0xf]
        %v1081 = vld [vmem:[%s1078 + $0x8] sm:$0xf]
        %v1082 = vld [vmem:[%s1078 + $0xc] sm:$0xf]
        %v1083 = vld [vmem:[%s1078 + $0x10] sm:$0xf]
        %v1084 = vld [vmem:[%s1078 + $0x14] sm:$0xf]
        %v1085 = vld [vmem:[%s1078 + $0x18] sm:$0xf]
        %v1086 = vld [vmem:[%s1078 + $0x1c] sm:$0xf]
        %v1087 = vld [vmem:[%s1078 + $0x20] sm:$0xf]
        %v1088 = vld [vmem:[%s1078 + $0x24] sm:$0xf]
        %v1089 = vld [vmem:[%s1078 + $0x28] sm:$0xf]
        %v1090 = vld [vmem:[%s1078 + $0x2c] sm:$0xf]
        %v1091 = vld [vmem:[%s1078 + $0x30] sm:$0xf]
        %v1092 = vld [vmem:[%s1078 + $0x34] sm:$0xf]
        %v1093 = vld [vmem:[%s1078 + $0x38] sm:$0xf]
        %v1094 = vld [vmem:[%s1078 + $0x3c] sm:$0xf]
        %v1095 = vld [vmem:[%s345 + $0x2] sm:$0x1]
        %v1096 = vlaneseq
        %v1097 = vshrl.u32 %v1096, 7
        %v1098 = vsub.s32 0, %v1097
        %v1099 = vrot.slane %v1095, %v1098
        %v1116 = vunpack.c.l.b16 %v1079
        %v1117 = vunpack.c.l.b16 %v1080
        %v1118 = vunpack.c.l.b16 %v1081
        %v1119 = vunpack.c.l.b16 %v1082
        %v1120 = vunpack.c.l.b16 %v1083
        %v1121 = vunpack.c.l.b16 %v1084
        %v1122 = vunpack.c.l.b16 %v1085
        %v1123 = vunpack.c.l.b16 %v1086
        %v1124 = vunpack.c.l.b16 %v1087
        %v1125 = vunpack.c.l.b16 %v1088
        %v1126 = vunpack.c.l.b16 %v1089
        %v1127 = vunpack.c.l.b16 %v1090
        %v1128 = vunpack.c.l.b16 %v1091
        %v1129 = vunpack.c.l.b16 %v1092
        %v1130 = vunpack.c.l.b16 %v1093
        %v1131 = vunpack.c.l.b16 %v1094
        %v1132 = vpack.c.b16 %v1117, %v1116
        %v1133 = vpack.c.b16 %v1119, %v1118
        %v1134 = vpack.c.b16 %v1121, %v1120
        %v1135 = vpack.c.b16 %v1123, %v1122
        %v1136 = vpack.c.b16 %v1125, %v1124
        %v1137 = vpack.c.b16 %v1127, %v1126
        %v1138 = vpack.c.b16 %v1129, %v1128
        %v1139 = vpack.c.b16 %v1131, %v1130
        %1148 = vmatprep.subr.bf16.mxu0 0
        %1149 = vmatpush1.bf16.msra.mxu0 %v1139
        %1150 = vmatprep.subr.bf16.mxu0 0
        %1151 = vmatpush1.bf16.msra.mxu0 %v1138
        %1152 = vmatprep.subr.bf16.mxu0 0
        %1153 = vmatpush1.bf16.msra.mxu0 %v1137
        %1154 = vmatprep.subr.bf16.mxu0 0
        %1155 = vmatpush1.bf16.msra.mxu0 %v1136
        %1156 = vmatprep.subr.bf16.mxu0 0
        %1157 = vmatpush1.bf16.msra.mxu0 %v1135
        %1158 = vmatprep.subr.bf16.mxu0 0
        %1159 = vmatpush1.bf16.msra.mxu0 %v1134
        %1160 = vmatprep.subr.bf16.mxu0 0
        %1161 = vmatpush1.bf16.msra.mxu0 %v1133
        %1162 = vmatprep.subr.bf16.mxu0 0
        %1163 = vmatpush1.bf16.msra.mxu0 %v1132
        %1164 = vmatprep.subr.bf16.mxu0 0
        %1165 = vmatpush2.bf16.msra.mxu0 0
        %1166 = vmatprep.subr.bf16.mxu0 0
        %1167 = vmatpush2.bf16.msra.mxu0 0
        %1168 = vmatprep.subr.bf16.mxu0 0
        %1169 = vmatpush2.bf16.msra.mxu0 0
        %1170 = vmatprep.subr.bf16.mxu0 0
        %1171 = vmatpush2.bf16.msra.mxu0 0
        %1172 = vmatprep.subr.bf16.mxu0 0
        %1173 = vmatpush2.bf16.msra.mxu0 0
        %1174 = vmatprep.subr.bf16.mxu0 0
        %1175 = vmatpush2.bf16.msra.mxu0 0
        %1176 = vmatprep.subr.bf16.mxu0 0
        %1177 = vmatpush2.bf16.msra.mxu0 0
        %1178 = vmatprep.subr.bf16.mxu0 0
        %1179 = vmatpush2.bf16.msra.mxu0 0
        %1180 = vmatprep.mubr.bf16.mxu0 0
        %1181 = vmatmul.mubr.bf16.gmra.mxu0 %v1077
        %v1182 = vpop.f32.mrf.mxu0
        %v1183 = vadd.f32 %v1099, %v1182
        %v1184 = vpop.f32.mrf.mxu0
        %v1185 = vpop.f32.mrf.mxu0
        %v1186 = vadd.f32 %v1099, %v1185
        %v1187 = vpop.f32.mrf.mxu0
        %1188 = vdwg.mxu0
        %v1189 = vmax.f32 %v1183, 0.0
        %v1190 = vmax.f32 %v1186, 0.0
        %v1191 = vpack.c.bf16 %v1190, %v1189
        %s1192 = scalar_lea.vmem %s336, 192 [#allocation10]
        %v1193 = vld [vmem:[%s1192] sm:$0xf]
        %v1194 = vld [vmem:[%s1192 + $0x4] sm:$0xf]
        %v1195 = vld [vmem:[%s1192 + $0x8] sm:$0xf]
        %v1196 = vld [vmem:[%s1192 + $0xc] sm:$0xf]
        %v1197 = vld [vmem:[%s1192 + $0x10] sm:$0xf]
        %v1198 = vld [vmem:[%s1192 + $0x14] sm:$0xf]
        %v1199 = vld [vmem:[%s1192 + $0x18] sm:$0xf]
        %v1200 = vld [vmem:[%s1192 + $0x1c] sm:$0xf]
        %v1201 = vld [vmem:[%s1192 + $0x20] sm:$0xf]
        %v1202 = vld [vmem:[%s1192 + $0x24] sm:$0xf]
        %v1203 = vld [vmem:[%s1192 + $0x28] sm:$0xf]
        %v1204 = vld [vmem:[%s1192 + $0x2c] sm:$0xf]
        %v1205 = vld [vmem:[%s1192 + $0x30] sm:$0xf]
        %v1206 = vld [vmem:[%s1192 + $0x34] sm:$0xf]
        %v1207 = vld [vmem:[%s1192 + $0x38] sm:$0xf]
        %v1208 = vld [vmem:[%s1192 + $0x3c] sm:$0xf]
        %v1209 = vld [vmem:[%s345 + $0x3] sm:$0x1]
        %v1210 = vlaneseq
        %v1211 = vshrl.u32 %v1210, 7
        %v1212 = vsub.s32 0, %v1211
        %v1213 = vrot.slane %v1209, %v1212
        %v1230 = vunpack.c.l.b16 %v1193
        %v1231 = vunpack.c.l.b16 %v1194
        %v1232 = vunpack.c.l.b16 %v1195
        %v1233 = vunpack.c.l.b16 %v1196
        %v1234 = vunpack.c.l.b16 %v1197
        %v1235 = vunpack.c.l.b16 %v1198
        %v1236 = vunpack.c.l.b16 %v1199
        %v1237 = vunpack.c.l.b16 %v1200
        %v1238 = vunpack.c.l.b16 %v1201
        %v1239 = vunpack.c.l.b16 %v1202
        %v1240 = vunpack.c.l.b16 %v1203
        %v1241 = vunpack.c.l.b16 %v1204
        %v1242 = vunpack.c.l.b16 %v1205
        %v1243 = vunpack.c.l.b16 %v1206
        %v1244 = vunpack.c.l.b16 %v1207
        %v1245 = vunpack.c.l.b16 %v1208
        %v1246 = vpack.c.b16 %v1231, %v1230
        %v1247 = vpack.c.b16 %v1233, %v1232
        %v1248 = vpack.c.b16 %v1235, %v1234
        %v1249 = vpack.c.b16 %v1237, %v1236
        %v1250 = vpack.c.b16 %v1239, %v1238
        %v1251 = vpack.c.b16 %v1241, %v1240
        %v1252 = vpack.c.b16 %v1243, %v1242
        %v1253 = vpack.c.b16 %v1245, %v1244
        %1262 = vmatprep.subr.bf16.mxu0 0
        %1263 = vmatpush1.bf16.msra.mxu0 %v1253
        %1264 = vmatprep.subr.bf16.mxu0 0
        %1265 = vmatpush1.bf16.msra.mxu0 %v1252
        %1266 = vmatprep.subr.bf16.mxu0 0
        %1267 = vmatpush1.bf16.msra.mxu0 %v1251
        %1268 = vmatprep.subr.bf16.mxu0 0
        %1269 = vmatpush1.bf16.msra.mxu0 %v1250
        %1270 = vmatprep.subr.bf16.mxu0 0
        %1271 = vmatpush1.bf16.msra.mxu0 %v1249
        %1272 = vmatprep.subr.bf16.mxu0 0
        %1273 = vmatpush1.bf16.msra.mxu0 %v1248
        %1274 = vmatprep.subr.bf16.mxu0 0
        %1275 = vmatpush1.bf16.msra.mxu0 %v1247
        %1276 = vmatprep.subr.bf16.mxu0 0
        %1277 = vmatpush1.bf16.msra.mxu0 %v1246
        %1278 = vmatprep.subr.bf16.mxu0 0
        %1279 = vmatpush2.bf16.msra.mxu0 0
        %1280 = vmatprep.subr.bf16.mxu0 0
        %1281 = vmatpush2.bf16.msra.mxu0 0
        %1282 = vmatprep.subr.bf16.mxu0 0
        %1283 = vmatpush2.bf16.msra.mxu0 0
        %1284 = vmatprep.subr.bf16.mxu0 0
        %1285 = vmatpush2.bf16.msra.mxu0 0
        %1286 = vmatprep.subr.bf16.mxu0 0
        %1287 = vmatpush2.bf16.msra.mxu0 0
        %1288 = vmatprep.subr.bf16.mxu0 0
        %1289 = vmatpush2.bf16.msra.mxu0 0
        %1290 = vmatprep.subr.bf16.mxu0 0
        %1291 = vmatpush2.bf16.msra.mxu0 0
        %1292 = vmatprep.subr.bf16.mxu0 0
        %1293 = vmatpush2.bf16.msra.mxu0 0
        %1294 = vmatprep.mubr.bf16.mxu0 0
        %1295 = vmatmul.mubr.bf16.gmra.mxu0 %v1191
        %v1296 = vpop.f32.mrf.mxu0
        %v1297 = vadd.f32 %v1213, %v1296
        %v1298 = vpop.f32.mrf.mxu0
        %v1299 = vpop.f32.mrf.mxu0
        %v1300 = vadd.f32 %v1213, %v1299
        %v1301 = vpop.f32.mrf.mxu0
        %1302 = vdwg.mxu0
        %1303 = vst [vmem:[%s383] sm:$0xff] %v1297
        %1304 = vst [vmem:[%s383 + $0x8] sm:$0xff] %v1300
        %s1305 = sand.u32 %s185, 1
        %s1306 = scalar_lea.sflag [#allocation6], %s1305
        %s1307 = sand.u32 %s185, 1
        %s1308 = smul.addr %s1307, 16
        %s1309 = scalar_lea.vmem [#allocation13], %s1308
        // Predicated region
        $region65: #{tpu_custom_call.1} parent=43 // pred_check
          %p1310 = pneg %p195
        $region66: #{tpu_custom_call.1} parent=43 // pred_check_branch
          %1312 = sbr.rel (%p1310) target = $region68
        $region67: #{tpu_custom_call.1} parent=43 // pred_region
          %s1313 = smul.u32 2, %s32
          %s1315 = ssub.s32 256, 256
          %1316 = vsyncadd %s1306, %s1315
          %s1317 = smul.addr %s1313, 128
          %s1318 = scalar_lea.hbm %s7, %s1317
          %s1319 = sshll.u32 %s1309, 4
          %s1320 = int_to_ptr.vmem [resolvable:$true] %s1319
          %1325 = dma.vmem_to_hbm [thread:$0]  %s1320, 256, %s1318, %s1306, 128, 128, 8
        $region68: #{tpu_custom_call.1} parent=43 // pred_fallthru
          _
      $region44: #{tpu_custom_call.1} parent=5 // pred_fallthru
        _
      %p1326 = scmp.le.s32.totalorder 2, %s27
      // Predicated region
      $region69: #{tpu_custom_call.1} parent=5 // pred_check
        %p1327 = pneg %p1326
      $region70: #{tpu_custom_call.1} parent=5 // pred_check_branch
        %1329 = sbr.rel (%p1327) target = $region72
      $region71: #{tpu_custom_call.1} parent=5 // pred_region
        %s1330 = ssub.s32 %s27, 2
        // Predicated region
        $region73: #{tpu_custom_call.1} parent=71 // pred_check
          %p1331 = pneg %p201
        $region74: #{tpu_custom_call.1} parent=71 // pred_check_branch
          %1333 = sbr.rel (%p1331) target = $region76
        $region75: #{tpu_custom_call.1} parent=71 // pred_region
          %s1334 = sand.u32 %s186, 1
          %s1335 = scalar_lea.sflag [#allocation6], %s1334
          %s1336 = sand.u32 %s186, 1
          %s1337 = smul.addr %s1336, 16
          %s1338 = scalar_lea.vmem [#allocation13], %s1337
          %1339 = dma.done %s1335, 256
        $region76: #{tpu_custom_call.1} parent=71 // pred_fallthru
          _
      $region72: #{tpu_custom_call.1} parent=5 // pred_fallthru
        _
    $region6: #{tpu_custom_call.1} parent=1 // loop_footer
      %s31 = sadd.s32 1, %s27
    $region7: #{tpu_custom_call.1} parent=1 // loop_footer_branch
      %26 = sbr.rel target = $region3
    $region8: #{tpu_custom_call.1} parent=1 // loop_exit
      _
    %1340 = vsyncpa [#allocation5], 1
    %s1341 = scalar_lea.sflag [#allocation5], 1
    %1342 = vsyncpa %s1341, 1
    %1343 = vsyncpa [#allocation8], 1
    %1344 = vsyncpa [#allocation11], 1
    %s1345 = scalar_lea.sflag [#allocation11], 1
    %1346 = vsyncpa %s1345, 1
    %1347 = vsyncpa [#allocation6], 1
    %s1348 = scalar_lea.sflag [#allocation6], 1
    %1349 = vsyncpa %s1348, 1

</llo_original>
